<compile_context>
chip_gen: v6e
topology: v6e:2x2x1
jax: 0.10.0
libtpu: 0.0.40
codegen_flags: <defaults>
</compile_context>

<pallas_src>
import jax
import jax.numpy as jnp
from jax import lax
from jax.experimental import pallas as pl
from jax.experimental.pallas import tpu as pltpu


def _round_up(x, m):
    return ((x + m - 1) // m) * m


def _tile_plan(M, cap=1024):
    """Fewest lane tiles with <= cap lanes each; LT is a multiple of 128.

    Returns (LT, NT, Mp) with Mp = NT * LT >= M.  Padding per (b, c) row is
    bounded by LT, and LT never collapses to 128 the way a divisor-of-Mp
    search does on unlucky shapes.
    """
    nt = -(-M // cap)                       # ceil(M / cap)
    lt = _round_up(-(-M // nt), 128)        # ceil(M / nt) rounded to 128
    return lt, nt, nt * lt


# ---------------------------------------------------------------------------
# Pass 1: Gram-matrix statistics.  Grid = (B, n_lane_tiles); per-batch Gram /
# sum accumulators stay VMEM-resident across the (arbitrary) lane axis, the
# batch axis is "parallel".  Zero-padded lanes contribute exactly 0 (no bias,
# no masking needed).  All per-step work is MXU matmuls.
# ---------------------------------------------------------------------------
def _gram_stats_kernel(xr_ref, xi_ref, gr_ref, gi_ref, sr_ref, si_ref):
    @pl.when(pl.program_id(1) == 0)
    def _():
        gr_ref[...] = jnp.zeros_like(gr_ref)
        gi_ref[...] = jnp.zeros_like(gi_ref)
        sr_ref[...] = jnp.zeros_like(sr_ref)
        si_ref[...] = jnp.zeros_like(si_ref)

    xr = xr_ref[0]                                   # (C, LT) bf16
    xi = xi_ref[0]
    dn = (((1,), (1,)), ((), ()))                    # contract the lane axis
    gr_ref[...] += lax.dot_general(xr, xr, dn,
                                   preferred_element_type=jnp.float32)[None]
    gi_ref[...] += lax.dot_general(xi, xi, dn,
                                   preferred_element_type=jnp.float32)[None]
    ones_col = jnp.ones((xr.shape[1], 1), dtype=xr.dtype)
    sr_ref[...] += jnp.dot(xr, ones_col, preferred_element_type=jnp.float32)[None]
    si_ref[...] += jnp.dot(xi, ones_col, preferred_element_type=jnp.float32)[None]


# ---------------------------------------------------------------------------
# Pass 2: 1x1 conv + BatchNorm (precomputed scale/shift) + ReLU +
# complex-weight gating.  Outputs are bf16 (consumed by irfft2 right away).
# ---------------------------------------------------------------------------
def _conv_bn_gate_kernel(xr_ref, xi_ref, wr_ref, wi_ref,
                         scr_ref, shr_ref, sci_ref, shi_ref,
                         cwr_ref, cwi_ref, gr_ref, gi_ref):
    yr = jnp.dot(wr_ref[...], xr_ref[0], preferred_element_type=jnp.float32)
    yi = jnp.dot(wi_ref[...], xi_ref[0], preferred_element_type=jnp.float32)
    zr = jnp.maximum(yr * scr_ref[...] + shr_ref[...], 0.0)
    zi = jnp.maximum(yi * sci_ref[...] + shi_ref[...], 0.0)
    wr = cwr_ref[...].astype(jnp.float32)
    wi = cwi_ref[...].astype(jnp.float32)
    # (zr + i*zi) * (wr + i*wi)
    gr_ref[...] = (zr * wr - zi * wi).astype(gr_ref.dtype)[None]
    gi_ref[...] = (zr * wi + zi * wr).astype(gi_ref.dtype)[None]


# ---------------------------------------------------------------------------
# Wrapper
# ---------------------------------------------------------------------------
def spectral_gating_forward(x, params, *, carry_dtype=jnp.bfloat16,
                            lane_tile_cap=1024):
    """x: (B, C, H, W) float32 (NCHW, same as the PyTorch module)."""
    B, C, H, W = x.shape
    A, bdim = W, H                       # module naming: a = W, b = H
    F = bdim // 2 + 1
    M = F * A                            # frequency pixels per (batch, channel)
    LT, NT, Mp = _tile_plan(M, lane_tile_cap)
    pad = Mp - M

    # TODO(synk): rfft2/irfft2 have no Pallas TPU primitive; they stay in jnp.fft.
    # The FFT is done directly on NCHW with axes=(3, 2) (full FFT over W, real
    # FFT over H), mathematically identical to the module's permute ->
    # rfft2(dim=(1,2)), removing both NCHW<->channel-last transposes.
    xf = jnp.fft.rfft2(x.astype(jnp.float32), axes=(3, 2), norm='ortho')  # (B,C,F,W)
    xr = jnp.pad(jnp.real(xf).reshape(B, C, M),
                 ((0, 0), (0, 0), (0, pad))).astype(carry_dtype)
    xi = jnp.pad(jnp.imag(xf).reshape(B, C, M),
                 ((0, 0), (0, 0), (0, pad))).astype(carry_dtype)

    w_r = params['conv_w_real'].astype(carry_dtype)        # (out, in) bf16
    w_i = params['conv_w_imag'].astype(carry_dtype)

    cw = params['complex_weight'].astype(jnp.float32)      # (A, F, C, 2)
    cw_r = jnp.pad(jnp.transpose(cw[..., 0], (2, 1, 0)).reshape(C, M),
                   ((0, 0), (0, pad))).astype(carry_dtype)  # (C, Mp)
    cw_i = jnp.pad(jnp.transpose(cw[..., 1], (2, 1, 0)).reshape(C, M),
                   ((0, 0), (0, pad))).astype(carry_dtype)

    # ------------------ pass 1: Gram statistics ------------------
    x_spec1 = pl.BlockSpec((1, C, LT), lambda b, t: (b, 0, t))
    gram_spec = pl.BlockSpec((1, C, C), lambda b, t: (b, 0, 0))
    sum_spec = pl.BlockSpec((1, C, 1), lambda b, t: (b, 0, 0))

    gr_g, gi_g, sr_b, si_b = pl.pallas_call(
        _gram_stats_kernel,
        out_shape=(jax.ShapeDtypeStruct((B, C, C), jnp.float32),
                   jax.ShapeDtypeStruct((B, C, C), jnp.float32),
                   jax.ShapeDtypeStruct((B, C, 1), jnp.float32),
                   jax.ShapeDtypeStruct((B, C, 1), jnp.float32)),
        grid=(B, NT),
        in_specs=[x_spec1, x_spec1],
        out_specs=(gram_spec, gram_spec, sum_spec, sum_spec),
        compiler_params=pltpu.CompilerParams(
            dimension_semantics=("parallel", "arbitrary"),
            vmem_limit_bytes=32 * 1024 * 1024),
    )(xr, xi)

    # BatchNorm (training mode) scale/shift per channel, recovered exactly
    # from the Gram / sum accumulators:
    #   sum(Wx)_c      = (W s)_c
    #   sum((Wx)^2)_c  = w_c G w_c^T
    eps = 1e-5
    n = jnp.float32(B * M)
    G_r = jnp.sum(gr_g, axis=0)                     # (C, C)
    G_i = jnp.sum(gi_g, axis=0)
    s_r = jnp.sum(sr_b, axis=0)[:, 0]               # (C,)
    s_i = jnp.sum(si_b, axis=0)[:, 0]
    w_r32 = w_r.astype(jnp.float32)                 # use the bf16-rounded weights
    w_i32 = w_i.astype(jnp.float32)                 # (matches what pass 2 applies)

    def bn_scale_shift(W32, G, svec, gamma, beta):
        mean = (W32 @ svec) / n                             # (C,)
        sumsq = jnp.sum((W32 @ G) * W32, axis=1)            # (C,)
        var = sumsq / n - mean * mean                       # biased variance
        scale = gamma / jnp.sqrt(var + eps)
        shift = beta - mean * scale
        return scale.reshape(C, 1), shift.reshape(C, 1)

    sc_r, sh_r = bn_scale_shift(w_r32, G_r, s_r,
                                params['bn_gamma_real'], params['bn_beta_real'])
    sc_i, sh_i = bn_scale_shift(w_i32, G_i, s_i,
                                params['bn_gamma_imag'], params['bn_beta_imag'])

    # ------------- pass 2: conv + BN + ReLU + complex gating -------------
    # Put the larger extent on the outer parallel axis (v7x megacore needs a
    # shardable axis).  When NT is outer, the complex_weight tile (index map
    # depends only on t) stays VMEM-resident across the inner batch sweep.
    t_outer = NT >= B

    def _b(i, j):
        return j if t_outer else i

    def _t(i, j):
        return i if t_outer else j

    grid2 = (NT, B) if t_outer else (B, NT)
    x_spec2 = pl.BlockSpec((1, C, LT), lambda i, j: (_b(i, j), 0, _t(i, j)))
    w_spec2 = pl.BlockSpec((C, C), lambda i, j: (0, 0))
    ss_spec2 = pl.BlockSpec((C, 1), lambda i, j: (0, 0))
    cw_spec2 = pl.BlockSpec((C, LT), lambda i, j: (0, _t(i, j)))
    out_spec2 = pl.BlockSpec((1, C, LT), lambda i, j: (_b(i, j), 0, _t(i, j)))

    gr, gi = pl.pallas_call(
        _conv_bn_gate_kernel,
        out_shape=(jax.ShapeDtypeStruct((B, C, Mp), carry_dtype),
                   jax.ShapeDtypeStruct((B, C, Mp), carry_dtype)),
        grid=grid2,
        in_specs=[x_spec2, x_spec2, w_spec2, w_spec2,
                  ss_spec2, ss_spec2, ss_spec2, ss_spec2,
                  cw_spec2, cw_spec2],
        out_specs=(out_spec2, out_spec2),
        compiler_params=pltpu.CompilerParams(
            dimension_semantics=("parallel", "parallel"),
            vmem_limit_bytes=32 * 1024 * 1024),
    )(xr, xi, w_r, w_i, sc_r, sh_r, sc_i, sh_i, cw_r, cw_i)

    g = (gr[:, :, :M].astype(jnp.float32)
         + 1j * gi[:, :, :M].astype(jnp.float32)).reshape(B, C, F, A)
    # Inverse FFT straight back to NCHW (real inverse over H, full over W).
    return jnp.fft.irfft2(g, s=(A, bdim), axes=(3, 2), norm='ortho')


# ---------------------------------------------------------------------------
# Pure-JAX reference (faithful f32 module math, module's own layout/permutes)
# ---------------------------------------------------------------------------
def reference_forward(x, params):
    B, C, H, W = x.shape
    a, bdim = W, H
    xp = jnp.transpose(x, (0, 3, 2, 1)).astype(jnp.float32)     # (B, a, b, C)
    xf = jnp.fft.rfft2(xp, axes=(1, 2), norm='ortho')           # (B, a, F, C)

    def branch(z, w, b, gamma, beta):
        y = jnp.einsum('bafc,oc->bafo', z, w) + b
        mean = jnp.mean(y, axis=(0, 1, 2))
        var = jnp.mean((y - mean) ** 2, axis=(0, 1, 2))
        y = (y - mean) / jnp.sqrt(var + 1e-5) * gamma + beta
        return jnp.maximum(y, 0.0)

    zr = branch(jnp.real(xf), params['conv_w_real'], params['conv_b_real'],
                params['bn_gamma_real'], params['bn_beta_real'])
    zi = branch(jnp.imag(xf), params['conv_w_imag'], params['conv_b_imag'],
                params['bn_gamma_imag'], params['bn_beta_imag'])
    wr = params['complex_weight'][..., 0]
    wi = params['complex_weight'][..., 1]
    xf2 = (zr + 1j * zi) * (wr + 1j * wi)
    xo = jnp.fft.irfft2(xf2, s=(a, bdim), axes=(1, 2), norm='ortho')  # (B,a,b,C)
    return jnp.transpose(xo, (0, 3, 2, 1))                             # (B,C,H,W)


# ---------------------------------------------------------------------------
# Deterministic parameter init (shapes from the module's __init__)
# ---------------------------------------------------------------------------
def init_params(key, dim, h, w):
    F = w // 2 + 1
    ks = jax.random.split(key, 5)
    bound = 1.0 / jnp.sqrt(jnp.float32(dim))      # Conv2d default init range
    return dict(
        conv_w_real=jax.random.uniform(ks[0], (dim, dim), jnp.float32, -bound, bound),
        conv_b_real=jax.random.uniform(ks[1], (dim,), jnp.float32, -bound, bound),
        conv_w_imag=jax.random.uniform(ks[2], (dim, dim), jnp.float32, -bound, bound),
        conv_b_imag=jax.random.uniform(ks[3], (dim,), jnp.float32, -bound, bound),
        bn_gamma_real=jnp.ones((dim,), jnp.float32),
        bn_beta_real=jnp.zeros((dim,), jnp.float32),
        bn_gamma_imag=jnp.ones((dim,), jnp.float32),
        bn_beta_imag=jnp.zeros((dim,), jnp.float32),
        complex_weight=0.02 * jax.random.normal(ks[4], (h, F, dim, 2), jnp.float32),
    )


if __name__ == "__main__":
    key = jax.random.PRNGKey(0)
    B, C, H, W = 2, 16, 16, 16
    # The module requires h == a (= W) and w//2+1 == H//2+1, i.e. h=W, w=H.
    h, w = W, H

    k_in, k_par = jax.random.split(key)
    x = jax.random.normal(k_in, (B, C, H, W), jnp.float32)
    params = init_params(k_par, C, h, w)

    fwd = jax.jit(spectral_gating_forward)
    out = jax.block_until_ready(fwd(x, params))

    ref = reference_forward(x, params)
    assert out.shape == (B, C, H, W)
    assert bool(jnp.all(jnp.isfinite(out)))
    # bf16 carriage of the frequency-domain tensors / weights / gated outputs
    # bounds agreement with the pure-f32 reference to ~1e-3 abs (scale ~3e-2).
    rel_l2 = float(jnp.linalg.norm(out - ref) / jnp.linalg.norm(ref))
    assert rel_l2 < 5e-2, f"relative L2 error too large: {rel_l2}"
    assert bool(jnp.allclose(out, ref, atol=2e-2, rtol=2e-2)), "mismatch vs reference"

    print("KERNEL_OK")
</pallas_src>

<mosaic_0001>
module attributes {stable_mosaic.version = 11 : i64} {
  func.func @_gram_stats_kernel(%arg0: i32, %arg1: i32, %arg2: memref<1x16x256xbf16, #tpu.memory_space<vmem>>, %arg3: memref<1x16x256xbf16, #tpu.memory_space<vmem>>, %arg4: memref<1x16x16xf32, #tpu.memory_space<vmem>>, %arg5: memref<1x16x16xf32, #tpu.memory_space<vmem>>, %arg6: memref<1x16x1xf32, #tpu.memory_space<vmem>>, %arg7: memref<1x16x1xf32, #tpu.memory_space<vmem>>) attributes {dimension_semantics = [#tpu.dimension_semantics<parallel>, #tpu.dimension_semantics<arbitrary>], iteration_bounds = array<i64: 2, 1>, scalar_prefetch = 0 : i64, scratch_operands = 0 : i64, tpu.core_type = #tpu.core_type<tc>, window_params = [{transform_indices = @transform_0, window_bounds = array<i64: 1, 16, 256>}, {transform_indices = @transform_1, window_bounds = array<i64: 1, 16, 256>}, {transform_indices = @transform_2, window_bounds = array<i64: 1, 16, 16>}, {transform_indices = @transform_3, window_bounds = array<i64: 1, 16, 16>}, {transform_indices = @transform_4, window_bounds = array<i64: 1, 16, 1>}, {transform_indices = @transform_5, window_bounds = array<i64: 1, 16, 1>}]} {
    %c0_i32 = arith.constant 0 : i32
    %0 = arith.cmpi eq, %arg1, %c0_i32 : i32
    %1 = arith.extui %0 : i1 to i32
    %c0_i32_0 = arith.constant 0 : i32
    %2 = arith.cmpi ne, %1, %c0_i32_0 : i32
    scf.if %2 {
      %cst_34 = arith.constant 0.000000e+00 : f32
      %28 = vector.broadcast %cst_34 : f32 to vector<1x16x16xf32>
      %c0_35 = arith.constant 0 : index
      %c0_36 = arith.constant 0 : index
      %c0_37 = arith.constant 0 : index
      %29 = vector.load %arg4[%c0_35, %c0_36, %c0_37] : memref<1x16x16xf32, #tpu.memory_space<vmem>>, vector<1x16x16xf32>
      tpu.vector_store %arg4[%c0_35, %c0_36, %c0_37], %28 {strides = array<i32>} : memref<1x16x16xf32, #tpu.memory_space<vmem>>, vector<1x16x16xf32>,
      %cst_38 = arith.constant 0.000000e+00 : f32
      %30 = vector.broadcast %cst_38 : f32 to vector<1x16x16xf32>
      %c0_39 = arith.constant 0 : index
      %c0_40 = arith.constant 0 : index
      %c0_41 = arith.constant 0 : index
      %31 = vector.load %arg5[%c0_39, %c0_40, %c0_41] : memref<1x16x16xf32, #tpu.memory_space<vmem>>, vector<1x16x16xf32>
      tpu.vector_store %arg5[%c0_39, %c0_40, %c0_41], %30 {strides = array<i32>} : memref<1x16x16xf32, #tpu.memory_space<vmem>>, vector<1x16x16xf32>,
      %cst_42 = arith.constant 0.000000e+00 : f32
      %32 = vector.broadcast %cst_42 : f32 to vector<1x16x1xf32>
      %c0_43 = arith.constant 0 : index
      %c0_44 = arith.constant 0 : index
      %c0_45 = arith.constant 0 : index
      %33 = vector.load %arg6[%c0_43, %c0_44, %c0_45] : memref<1x16x1xf32, #tpu.memory_space<vmem>>, vector<1x16x1xf32>
      tpu.vector_store %arg6[%c0_43, %c0_44, %c0_45], %32 {strides = array<i32>} : memref<1x16x1xf32, #tpu.memory_space<vmem>>, vector<1x16x1xf32>,
      %cst_46 = arith.constant 0.000000e+00 : f32
      %34 = vector.broadcast %cst_46 : f32 to vector<1x16x1xf32>
      %c0_47 = arith.constant 0 : index
      %c0_48 = arith.constant 0 : index
      %c0_49 = arith.constant 0 : index
      %35 = vector.load %arg7[%c0_47, %c0_48, %c0_49] : memref<1x16x1xf32, #tpu.memory_space<vmem>>, vector<1x16x1xf32>
      tpu.vector_store %arg7[%c0_47, %c0_48, %c0_49], %34 {strides = array<i32>} : memref<1x16x1xf32, #tpu.memory_space<vmem>>, vector<1x16x1xf32>,
    } else {
    }
    %c0 = arith.constant 0 : index
    %c0_1 = arith.constant 0 : index
    %c0_2 = arith.constant 0 : index
    %3 = vector.load %arg2[%c0, %c0_1, %c0_2] : memref<1x16x256xbf16, #tpu.memory_space<vmem>>, vector<1x16x256xbf16>
    %4 = vector.shape_cast %3 : vector<1x16x256xbf16> to vector<16x256xbf16>
    %c0_3 = arith.constant 0 : index
    %c0_4 = arith.constant 0 : index
    %c0_5 = arith.constant 0 : index
    %5 = vector.load %arg3[%c0_3, %c0_4, %c0_5] : memref<1x16x256xbf16, #tpu.memory_space<vmem>>, vector<1x16x256xbf16>
    %6 = vector.shape_cast %5 : vector<1x16x256xbf16> to vector<16x256xbf16>
    %c0_6 = arith.constant 0 : index
    %c0_7 = arith.constant 0 : index
    %c0_8 = arith.constant 0 : index
    %7 = vector.load %arg4[%c0_6, %c0_7, %c0_8] : memref<1x16x16xf32, #tpu.memory_space<vmem>>, vector<1x16x16xf32>
    %cst = arith.constant dense<0.000000e+00> : vector<16x16xf32>
    %8 = tpu.matmul %4, %4, %cst {dimension_numbers = #tpu.dot_dimension_numbers<[1], [1], [0], [0], [0, 0, 1, 0], [], []>} : vector<16x256xbf16>, vector<16x256xbf16>, vector<16x16xf32> -> vector<16x16xf32>
    %9 = vector.shape_cast %8 : vector<16x16xf32> to vector<1x16x16xf32>
    %10 = arith.addf %7, %9 : vector<1x16x16xf32>
    %c0_9 = arith.constant 0 : index
    %c0_10 = arith.constant 0 : index
    %c0_11 = arith.constant 0 : index
    %11 = vector.load %arg4[%c0_9, %c0_10, %c0_11] : memref<1x16x16xf32, #tpu.memory_space<vmem>>, vector<1x16x16xf32>
    tpu.vector_store %arg4[%c0_9, %c0_10, %c0_11], %10 {strides = array<i32>} : memref<1x16x16xf32, #tpu.memory_space<vmem>>, vector<1x16x16xf32>,
    %c0_12 = arith.constant 0 : index
    %c0_13 = arith.constant 0 : index
    %c0_14 = arith.constant 0 : index
    %12 = vector.load %arg5[%c0_12, %c0_13, %c0_14] : memref<1x16x16xf32, #tpu.memory_space<vmem>>, vector<1x16x16xf32>
    %cst_15 = arith.constant dense<0.000000e+00> : vector<16x16xf32>
    %13 = tpu.matmul %6, %6, %cst_15 {dimension_numbers = #tpu.dot_dimension_numbers<[1], [1], [0], [0], [0, 0, 1, 0], [], []>} : vector<16x256xbf16>, vector<16x256xbf16>, vector<16x16xf32> -> vector<16x16xf32>
    %14 = vector.shape_cast %13 : vector<16x16xf32> to vector<1x16x16xf32>
    %15 = arith.addf %12, %14 : vector<1x16x16xf32>
    %c0_16 = arith.constant 0 : index
    %c0_17 = arith.constant 0 : index
    %c0_18 = arith.constant 0 : index
    %16 = vector.load %arg5[%c0_16, %c0_17, %c0_18] : memref<1x16x16xf32, #tpu.memory_space<vmem>>, vector<1x16x16xf32>
    tpu.vector_store %arg5[%c0_16, %c0_17, %c0_18], %15 {strides = array<i32>} : memref<1x16x16xf32, #tpu.memory_space<vmem>>, vector<1x16x16xf32>,
    %cst_19 = arith.constant 1.000000e+00 : bf16
    %17 = vector.broadcast %cst_19 : bf16 to vector<256x1xbf16>
    %c0_20 = arith.constant 0 : index
    %c0_21 = arith.constant 0 : index
    %c0_22 = arith.constant 0 : index
    %18 = vector.load %arg6[%c0_20, %c0_21, %c0_22] : memref<1x16x1xf32, #tpu.memory_space<vmem>>, vector<1x16x1xf32>
    %cst_23 = arith.constant dense<0.000000e+00> : vector<16x1xf32>
    %19 = tpu.matmul %4, %17, %cst_23 {dimension_numbers = #tpu.dot_dimension_numbers<[1], [0], [0], [1], [0, 0, 1, 1], [], []>} : vector<16x256xbf16>, vector<256x1xbf16>, vector<16x1xf32> -> vector<16x1xf32>
    %20 = vector.shape_cast %19 : vector<16x1xf32> to vector<1x16x1xf32>
    %21 = arith.addf %18, %20 : vector<1x16x1xf32>
    %c0_24 = arith.constant 0 : index
    %c0_25 = arith.constant 0 : index
    %c0_26 = arith.constant 0 : index
    %22 = vector.load %arg6[%c0_24, %c0_25, %c0_26] : memref<1x16x1xf32, #tpu.memory_space<vmem>>, vector<1x16x1xf32>
    tpu.vector_store %arg6[%c0_24, %c0_25, %c0_26], %21 {strides = array<i32>} : memref<1x16x1xf32, #tpu.memory_space<vmem>>, vector<1x16x1xf32>,
    %c0_27 = arith.constant 0 : index
    %c0_28 = arith.constant 0 : index
    %c0_29 = arith.constant 0 : index
    %23 = vector.load %arg7[%c0_27, %c0_28, %c0_29] : memref<1x16x1xf32, #tpu.memory_space<vmem>>, vector<1x16x1xf32>
    %cst_30 = arith.constant dense<0.000000e+00> : vector<16x1xf32>
    %24 = tpu.matmul %6, %17, %cst_30 {dimension_numbers = #tpu.dot_dimension_numbers<[1], [0], [0], [1], [0, 0, 1, 1], [], []>} : vector<16x256xbf16>, vector<256x1xbf16>, vector<16x1xf32> -> vector<16x1xf32>
    %25 = vector.shape_cast %24 : vector<16x1xf32> to vector<1x16x1xf32>
    %26 = arith.addf %23, %25 : vector<1x16x1xf32>
    %c0_31 = arith.constant 0 : index
    %c0_32 = arith.constant 0 : index
    %c0_33 = arith.constant 0 : index
    %27 = vector.load %arg7[%c0_31, %c0_32, %c0_33] : memref<1x16x1xf32, #tpu.memory_space<vmem>>, vector<1x16x1xf32>
    tpu.vector_store %arg7[%c0_31, %c0_32, %c0_33], %26 {strides = array<i32>} : memref<1x16x1xf32, #tpu.memory_space<vmem>>, vector<1x16x1xf32>,
    return
  }
  func.func @transform_0(%arg0: i32, %arg1: i32) -> (i32, i32, i32) {
    %c0_i32 = arith.constant 0 : i32
    %c0_i32_0 = arith.constant 0 : i32
    return %arg0, %c0_i32, %arg1 : i32, i32, i32
  }
  func.func @transform_1(%arg0: i32, %arg1: i32) -> (i32, i32, i32) {
    %c0_i32 = arith.constant 0 : i32
    %c0_i32_0 = arith.constant 0 : i32
    return %arg0, %c0_i32, %arg1 : i32, i32, i32
  }
  func.func @transform_2(%arg0: i32, %arg1: i32) -> (i32, i32, i32) {
    %c0_i32 = arith.constant 0 : i32
    %c0_i32_0 = arith.constant 0 : i32
    %c0_i32_1 = arith.constant 0 : i32
    return %arg0, %c0_i32, %c0_i32_0 : i32, i32, i32
  }
  func.func @transform_3(%arg0: i32, %arg1: i32) -> (i32, i32, i32) {
    %c0_i32 = arith.constant 0 : i32
    %c0_i32_0 = arith.constant 0 : i32
    %c0_i32_1 = arith.constant 0 : i32
    return %arg0, %c0_i32, %c0_i32_0 : i32, i32, i32
  }
  func.func @transform_4(%arg0: i32, %arg1: i32) -> (i32, i32, i32) {
    %c0_i32 = arith.constant 0 : i32
    %c0_i32_0 = arith.constant 0 : i32
    %c0_i32_1 = arith.constant 0 : i32
    return %arg0, %c0_i32, %c0_i32_0 : i32, i32, i32
  }
  func.func @transform_5(%arg0: i32, %arg1: i32) -> (i32, i32, i32) {
    %c0_i32 = arith.constant 0 : i32
    %c0_i32_0 = arith.constant 0 : i32
    %c0_i32_1 = arith.constant 0 : i32
    return %arg0, %c0_i32, %c0_i32_0 : i32, i32, i32
  }
}

module attributes {stable_mosaic.version = 11 : i64} {
  func.func @_conv_bn_gate_kernel(%arg0: i32, %arg1: i32, %arg2: memref<1x16x256xbf16, #tpu.memory_space<vmem>>, %arg3: memref<1x16x256xbf16, #tpu.memory_space<vmem>>, %arg4: memref<16x16xbf16, #tpu.memory_space<vmem>>, %arg5: memref<16x16xbf16, #tpu.memory_space<vmem>>, %arg6: memref<16x1xf32, #tpu.memory_space<vmem>>, %arg7: memref<16x1xf32, #tpu.memory_space<vmem>>, %arg8: memref<16x1xf32, #tpu.memory_space<vmem>>, %arg9: memref<16x1xf32, #tpu.memory_space<vmem>>, %arg10: memref<16x256xbf16, #tpu.memory_space<vmem>>, %arg11: memref<16x256xbf16, #tpu.memory_space<vmem>>, %arg12: memref<1x16x256xbf16, #tpu.memory_space<vmem>>, %arg13: memref<1x16x256xbf16, #tpu.memory_space<vmem>>) attributes {dimension_semantics = [#tpu.dimension_semantics<parallel>, #tpu.dimension_semantics<parallel>], iteration_bounds = array<i64: 2, 1>, scalar_prefetch = 0 : i64, scratch_operands = 0 : i64, tpu.core_type = #tpu.core_type<tc>, window_params = [{transform_indices = @transform_0, window_bounds = array<i64: 1, 16, 256>}, {transform_indices = @transform_1, window_bounds = array<i64: 1, 16, 256>}, {pipeline_mode = #tpu.pipeline_mode<synchronous>, transform_indices = @transform_2, window_bounds = array<i64: 16, 16>}, {pipeline_mode = #tpu.pipeline_mode<synchronous>, transform_indices = @transform_3, window_bounds = array<i64: 16, 16>}, {pipeline_mode = #tpu.pipeline_mode<synchronous>, transform_indices = @transform_4, window_bounds = array<i64: 16, 1>}, {pipeline_mode = #tpu.pipeline_mode<synchronous>, transform_indices = @transform_5, window_bounds = array<i64: 16, 1>}, {pipeline_mode = #tpu.pipeline_mode<synchronous>, transform_indices = @transform_6, window_bounds = array<i64: 16, 1>}, {pipeline_mode = #tpu.pipeline_mode<synchronous>, transform_indices = @transform_7, window_bounds = array<i64: 16, 1>}, {transform_indices = @transform_8, window_bounds = array<i64: 16, 256>}, {transform_indices = @transform_9, window_bounds = array<i64: 16, 256>}, {transform_indices = @transform_10, window_bounds = array<i64: 1, 16, 256>}, {transform_indices = @transform_11, window_bounds = array<i64: 1, 16, 256>}]} {
    %c0 = arith.constant 0 : index
    %c0_0 = arith.constant 0 : index
    %0 = vector.load %arg4[%c0, %c0_0] : memref<16x16xbf16, #tpu.memory_space<vmem>>, vector<16x16xbf16>
    %c0_1 = arith.constant 0 : index
    %c0_2 = arith.constant 0 : index
    %c0_3 = arith.constant 0 : index
    %1 = vector.load %arg2[%c0_1, %c0_2, %c0_3] : memref<1x16x256xbf16, #tpu.memory_space<vmem>>, vector<1x16x256xbf16>
    %2 = vector.shape_cast %1 : vector<1x16x256xbf16> to vector<16x256xbf16>
    %cst = arith.constant dense<0.000000e+00> : vector<16x256xf32>
    %3 = tpu.matmul %0, %2, %cst {dimension_numbers = #tpu.dot_dimension_numbers<[1], [0], [0], [1], [0, 0, 1, 1], [], []>} : vector<16x16xbf16>, vector<16x256xbf16>, vector<16x256xf32> -> vector<16x256xf32>
    %c0_4 = arith.constant 0 : index
    %c0_5 = arith.constant 0 : index
    %4 = vector.load %arg5[%c0_4, %c0_5] : memref<16x16xbf16, #tpu.memory_space<vmem>>, vector<16x16xbf16>
    %c0_6 = arith.constant 0 : index
    %c0_7 = arith.constant 0 : index
    %c0_8 = arith.constant 0 : index
    %5 = vector.load %arg3[%c0_6, %c0_7, %c0_8] : memref<1x16x256xbf16, #tpu.memory_space<vmem>>, vector<1x16x256xbf16>
    %6 = vector.shape_cast %5 : vector<1x16x256xbf16> to vector<16x256xbf16>
    %cst_9 = arith.constant dense<0.000000e+00> : vector<16x256xf32>
    %7 = tpu.matmul %4, %6, %cst_9 {dimension_numbers = #tpu.dot_dimension_numbers<[1], [0], [0], [1], [0, 0, 1, 1], [], []>} : vector<16x16xbf16>, vector<16x256xbf16>, vector<16x256xf32> -> vector<16x256xf32>
    %c0_10 = arith.constant 0 : index
    %c0_11 = arith.constant 0 : index
    %8 = vector.load %arg6[%c0_10, %c0_11] : memref<16x1xf32, #tpu.memory_space<vmem>>, vector<16x1xf32>
    %9 = vector.broadcast %8 : vector<16x1xf32> to vector<16x256xf32>
    %10 = arith.mulf %3, %9 : vector<16x256xf32>
    %c0_12 = arith.constant 0 : index
    %c0_13 = arith.constant 0 : index
    %11 = vector.load %arg7[%c0_12, %c0_13] : memref<16x1xf32, #tpu.memory_space<vmem>>, vector<16x1xf32>
    %12 = vector.broadcast %11 : vector<16x1xf32> to vector<16x256xf32>
    %13 = arith.addf %10, %12 : vector<16x256xf32>
    %cst_14 = arith.constant 0.000000e+00 : f32
    %14 = vector.broadcast %cst_14 : f32 to vector<16x256xf32>
    %15 = arith.maximumf %13, %14 : vector<16x256xf32>
    %c0_15 = arith.constant 0 : index
    %c0_16 = arith.constant 0 : index
    %16 = vector.load %arg8[%c0_15, %c0_16] : memref<16x1xf32, #tpu.memory_space<vmem>>, vector<16x1xf32>
    %17 = vector.broadcast %16 : vector<16x1xf32> to vector<16x256xf32>
    %18 = arith.mulf %7, %17 : vector<16x256xf32>
    %c0_17 = arith.constant 0 : index
    %c0_18 = arith.constant 0 : index
    %19 = vector.load %arg9[%c0_17, %c0_18] : memref<16x1xf32, #tpu.memory_space<vmem>>, vector<16x1xf32>
    %20 = vector.broadcast %19 : vector<16x1xf32> to vector<16x256xf32>
    %21 = arith.addf %18, %20 : vector<16x256xf32>
    %cst_19 = arith.constant 0.000000e+00 : f32
    %22 = vector.broadcast %cst_19 : f32 to vector<16x256xf32>
    %23 = arith.maximumf %21, %22 : vector<16x256xf32>
    %c0_20 = arith.constant 0 : index
    %c0_21 = arith.constant 0 : index
    %24 = vector.load %arg10[%c0_20, %c0_21] : memref<16x256xbf16, #tpu.memory_space<vmem>>, vector<16x256xbf16>
    %25 = arith.extf %24 : vector<16x256xbf16> to vector<16x256xf32>
    %c0_22 = arith.constant 0 : index
    %c0_23 = arith.constant 0 : index
    %26 = vector.load %arg11[%c0_22, %c0_23] : memref<16x256xbf16, #tpu.memory_space<vmem>>, vector<16x256xbf16>
    %27 = arith.extf %26 : vector<16x256xbf16> to vector<16x256xf32>
    %28 = arith.mulf %15, %25 : vector<16x256xf32>
    %29 = arith.mulf %23, %27 : vector<16x256xf32>
    %30 = arith.subf %28, %29 : vector<16x256xf32>
    %31 = arith.truncf %30 : vector<16x256xf32> to vector<16x256xbf16>
    %32 = vector.shape_cast %31 : vector<16x256xbf16> to vector<1x16x256xbf16>
    %c0_24 = arith.constant 0 : index
    %c0_25 = arith.constant 0 : index
    %c0_26 = arith.constant 0 : index
    %33 = vector.load %arg12[%c0_24, %c0_25, %c0_26] : memref<1x16x256xbf16, #tpu.memory_space<vmem>>, vector<1x16x256xbf16>
    tpu.vector_store %arg12[%c0_24, %c0_25, %c0_26], %32 {strides = array<i32>} : memref<1x16x256xbf16, #tpu.memory_space<vmem>>, vector<1x16x256xbf16>,
    %34 = arith.mulf %15, %27 : vector<16x256xf32>
    %35 = arith.mulf %23, %25 : vector<16x256xf32>
    %36 = arith.addf %34, %35 : vector<16x256xf32>
    %37 = arith.truncf %36 : vector<16x256xf32> to vector<16x256xbf16>
    %38 = vector.shape_cast %37 : vector<16x256xbf16> to vector<1x16x256xbf16>
    %c0_27 = arith.constant 0 : index
    %c0_28 = arith.constant 0 : index
    %c0_29 = arith.constant 0 : index
    %39 = vector.load %arg13[%c0_27, %c0_28, %c0_29] : memref<1x16x256xbf16, #tpu.memory_space<vmem>>, vector<1x16x256xbf16>
    tpu.vector_store %arg13[%c0_27, %c0_28, %c0_29], %38 {strides = array<i32>} : memref<1x16x256xbf16, #tpu.memory_space<vmem>>, vector<1x16x256xbf16>,
    return
  }
  func.func @transform_0(%arg0: i32, %arg1: i32) -> (i32, i32, i32) {
    %c0_i32 = arith.constant 0 : i32
    %c0_i32_0 = arith.constant 0 : i32
    return %arg0, %c0_i32, %arg1 : i32, i32, i32
  }
  func.func @transform_1(%arg0: i32, %arg1: i32) -> (i32, i32, i32) {
    %c0_i32 = arith.constant 0 : i32
    %c0_i32_0 = arith.constant 0 : i32
    return %arg0, %c0_i32, %arg1 : i32, i32, i32
  }
  func.func @transform_2(%arg0: i32, %arg1: i32) -> (i32, i32) {
    %c0_i32 = arith.constant 0 : i32
    %c0_i32_0 = arith.constant 0 : i32
    %c0_i32_1 = arith.constant 0 : i32
    return %c0_i32, %c0_i32_0 : i32, i32
  }
  func.func @transform_3(%arg0: i32, %arg1: i32) -> (i32, i32) {
    %c0_i32 = arith.constant 0 : i32
    %c0_i32_0 = arith.constant 0 : i32
    %c0_i32_1 = arith.constant 0 : i32
    return %c0_i32, %c0_i32_0 : i32, i32
  }
  func.func @transform_4(%arg0: i32, %arg1: i32) -> (i32, i32) {
    %c0_i32 = arith.constant 0 : i32
    %c0_i32_0 = arith.constant 0 : i32
    %c0_i32_1 = arith.constant 0 : i32
    return %c0_i32, %c0_i32_0 : i32, i32
  }
  func.func @transform_5(%arg0: i32, %arg1: i32) -> (i32, i32) {
    %c0_i32 = arith.constant 0 : i32
    %c0_i32_0 = arith.constant 0 : i32
    %c0_i32_1 = arith.constant 0 : i32
    return %c0_i32, %c0_i32_0 : i32, i32
  }
  func.func @transform_6(%arg0: i32, %arg1: i32) -> (i32, i32) {
    %c0_i32 = arith.constant 0 : i32
    %c0_i32_0 = arith.constant 0 : i32
    %c0_i32_1 = arith.constant 0 : i32
    return %c0_i32, %c0_i32_0 : i32, i32
  }
  func.func @transform_7(%arg0: i32, %arg1: i32) -> (i32, i32) {
    %c0_i32 = arith.constant 0 : i32
    %c0_i32_0 = arith.constant 0 : i32
    %c0_i32_1 = arith.constant 0 : i32
    return %c0_i32, %c0_i32_0 : i32, i32
  }
  func.func @transform_8(%arg0: i32, %arg1: i32) -> (i32, i32) {
    %c0_i32 = arith.constant 0 : i32
    %c0_i32_0 = arith.constant 0 : i32
    return %c0_i32, %arg1 : i32, i32
  }
  func.func @transform_9(%arg0: i32, %arg1: i32) -> (i32, i32) {
    %c0_i32 = arith.constant 0 : i32
    %c0_i32_0 = arith.constant 0 : i32
    return %c0_i32, %arg1 : i32, i32
  }
  func.func @transform_10(%arg0: i32, %arg1: i32) -> (i32, i32, i32) {
    %c0_i32 = arith.constant 0 : i32
    %c0_i32_0 = arith.constant 0 : i32
    return %arg0, %c0_i32, %arg1 : i32, i32, i32
  }
  func.func @transform_11(%arg0: i32, %arg1: i32) -> (i32, i32, i32) {
    %c0_i32 = arith.constant 0 : i32
    %c0_i32_0 = arith.constant 0 : i32
    return %arg0, %c0_i32, %arg1 : i32, i32, i32
  }
}

</mosaic_0001>

<llo_original>
// kernel: spectral_gating_forward.2
$region0: #{spectral_gating_forward.2}
  #allocation0 [shape = 'u32[]', space=smem, size = 0x4, offset = 0x4, fixed_abs, tag = 'smem constant byte address 0x4 - core index']
  #allocation1 [shape = 'u32[144,128]{1,0:T(1,128)}', space=vmem, size = 0x12000, scoped, tag = 'internal scratch']
  %s0 = inlined_call_operand.vmem [shape: bf16[2,16,256], index: 0, kind: input, shape index: {}]
  %s1 = inlined_call_operand.vmem [shape: bf16[2,16,256], index: 1, kind: input, shape index: {}]
  %s2 = inlined_call_operand.vmem [shape: f32[2,16,16], index: 2, kind: output, shape index: {0}]
  %s3 = inlined_call_operand.vmem [shape: f32[2,16,16], index: 3, kind: output, shape index: {1}]
  %s4 = inlined_call_operand.vmem [shape: f32[2,16,1], index: 4, kind: output, shape index: {2}]
  %s5 = inlined_call_operand.vmem [shape: f32[2,16,1], index: 5, kind: output, shape index: {3}]
  %6 = xla_tuple %s2, %s3, %s4, %s5
  %s7 = sld [smem:[#allocation0]]
  $region69: #{spectral_gating_forward.2} parent=0
    _
  %s9 = ssub.s32 1, %s7
  %s10 = scalar_select 0, %s9, %s7
  loop: start=0, step=1, limit=4
  $region2: #{spectral_gating_forward.2} parent=0 // loop_pre_header
    _
  $region3: #{spectral_gating_forward.2} parent=0 // loop_header
    %s12 = sphi 0, %s16
    %p13 = scmp.ge.s32.totalorder %s12, 4
    %s19 = sphi 0, %s31
    %s20 = sphi 0, %s27
    %s21 = sphi 0, %s19
    %s22 = sphi 0, %s20
    %s23 = sphi 0, %s21
    %s24 = sphi 0, %s22
    %s36 = sphi 0, %s38
    %s39 = sphi 0, %s36
    %s40 = sphi 0, %s39
    %s56 = sphi 0, %s40
    %s64 = sphi 0, %s66
    %s67 = sphi 0, %s64
    %s68 = sphi 0, %s67
    %s84 = sphi 0, %s68
    %s90 = sphi 0, %s92
    %s93 = sphi 0, %s90
    %s94 = sphi 0, %s93
    %s110 = sphi 0, %s94
    %s116 = sphi 0, %s118
    %s119 = sphi 0, %s116
    %s120 = sphi 0, %s119
    %s136 = sphi 0, %s120
    %s142 = sphi 0, %s144
    %s145 = sphi 0, %s142
    %s146 = sphi 0, %s145
    %s162 = sphi 0, %s146
    %s168 = sphi 0, %s170
    %s171 = sphi 0, %s168
    %s172 = sphi 0, %s171
    %s188 = sphi 0, %s172
  $region4: #{spectral_gating_forward.2} parent=0 // loop_header_branch
    %15 = sbr.rel (%p13) target = $region8
  $region5: #{spectral_gating_forward.2} parent=0 // loop_body
    %s17 = ssub.s32 %s12, 1
    %s18 = ssub.s32 %s12, 2
    %s25 = sadd.s32 1, %s20
    %p26 = scmp.ge.s32.totalorder %s25, 1
    %s27 = scalar_select %p26, 0, %s25
    %s28 = sadd.s32 1, %s19
    %s29 = scalar_select %p26, %s28, %s19
    %p30 = scmp.ge.s32.totalorder %s29, 2
    %s31 = scalar_select %p30, 0, %s29
    %s32 = ssub.s32 %s19, %s31
    %s33 = ssub.s32 %s20, %s27
    %s34 = sor.u32 %s32, %s33
    %p35 = scmp.eq.s32.totalorder %s34, 0
    %s37 = sadd.s32 %s36, 1
    %s38 = scalar_select %p35, %s36, %s37
    %p41 = pneg %p35
    %p42 = scmp.eq.s32.totalorder %s12, 1
    %p43 = por %p41, %p42
    %p44 = scmp.ne.s32.totalorder %s36, %s39
    %p45 = scmp.eq.s32.totalorder %s12, 0
    %p46 = por %p44, %p45
    %p47 = scmp.ne.s32.totalorder %s36, %s39
    %p48 = scmp.eq.s32.totalorder %s17, 1
    %p49 = por %p47, %p48
    %p50 = scmp.ne.s32.totalorder %s39, %s40
    %p51 = scmp.eq.s32.totalorder %s17, 0
    %p52 = por %p50, %p51
    %p53 = scmp.ne.s32.totalorder %s39, %s40
    %p54 = scmp.eq.s32.totalorder %s18, 1
    %p55 = por %p53, %p54
    %p57 = scmp.ne.s32.totalorder %s40, %s56
    %p58 = scmp.eq.s32.totalorder %s18, 0
    %p59 = por %p57, %p58
    %s60 = ssub.s32 %s19, %s31
    %s61 = ssub.s32 %s20, %s27
    %s62 = sor.u32 %s60, %s61
    %p63 = scmp.eq.s32.totalorder %s62, 0
    %s65 = sadd.s32 %s64, 1
    %s66 = scalar_select %p63, %s64, %s65
    %p69 = pneg %p63
    %p70 = scmp.eq.s32.totalorder %s12, 1
    %p71 = por %p69, %p70
    %p72 = scmp.ne.s32.totalorder %s64, %s67
    %p73 = scmp.eq.s32.totalorder %s12, 0
    %p74 = por %p72, %p73
    %p75 = scmp.ne.s32.totalorder %s64, %s67
    %p76 = scmp.eq.s32.totalorder %s17, 1
    %p77 = por %p75, %p76
    %p78 = scmp.ne.s32.totalorder %s67, %s68
    %p79 = scmp.eq.s32.totalorder %s17, 0
    %p80 = por %p78, %p79
    %p81 = scmp.ne.s32.totalorder %s67, %s68
    %p82 = scmp.eq.s32.totalorder %s18, 1
    %p83 = por %p81, %p82
    %p85 = scmp.ne.s32.totalorder %s68, %s84
    %p86 = scmp.eq.s32.totalorder %s18, 0
    %p87 = por %p85, %p86
    %s88 = ssub.s32 %s19, %s31
    %p89 = scmp.eq.s32.totalorder %s88, 0
    %s91 = sadd.s32 %s90, 1
    %s92 = scalar_select %p89, %s90, %s91
    %p95 = pneg %p89
    %p96 = scmp.eq.s32.totalorder %s12, 1
    %p97 = por %p95, %p96
    %p98 = scmp.ne.s32.totalorder %s90, %s93
    %p99 = scmp.eq.s32.totalorder %s12, 0
    %p100 = por %p98, %p99
    %p101 = scmp.ne.s32.totalorder %s90, %s93
    %p102 = scmp.eq.s32.totalorder %s17, 1
    %p103 = por %p101, %p102
    %p104 = scmp.ne.s32.totalorder %s93, %s94
    %p105 = scmp.eq.s32.totalorder %s17, 0
    %p106 = por %p104, %p105
    %p107 = scmp.ne.s32.totalorder %s93, %s94
    %p108 = scmp.eq.s32.totalorder %s18, 1
    %p109 = por %p107, %p108
    %p111 = scmp.ne.s32.totalorder %s94, %s110
    %p112 = scmp.eq.s32.totalorder %s18, 0
    %p113 = por %p111, %p112
    %s114 = ssub.s32 %s19, %s31
    %p115 = scmp.eq.s32.totalorder %s114, 0
    %s117 = sadd.s32 %s116, 1
    %s118 = scalar_select %p115, %s116, %s117
    %p121 = pneg %p115
    %p122 = scmp.eq.s32.totalorder %s12, 1
    %p123 = por %p121, %p122
    %p124 = scmp.ne.s32.totalorder %s116, %s119
    %p125 = scmp.eq.s32.totalorder %s12, 0
    %p126 = por %p124, %p125
    %p127 = scmp.ne.s32.totalorder %s116, %s119
    %p128 = scmp.eq.s32.totalorder %s17, 1
    %p129 = por %p127, %p128
    %p130 = scmp.ne.s32.totalorder %s119, %s120
    %p131 = scmp.eq.s32.totalorder %s17, 0
    %p132 = por %p130, %p131
    %p133 = scmp.ne.s32.totalorder %s119, %s120
    %p134 = scmp.eq.s32.totalorder %s18, 1
    %p135 = por %p133, %p134
    %p137 = scmp.ne.s32.totalorder %s120, %s136
    %p138 = scmp.eq.s32.totalorder %s18, 0
    %p139 = por %p137, %p138
    %s140 = ssub.s32 %s19, %s31
    %p141 = scmp.eq.s32.totalorder %s140, 0
    %s143 = sadd.s32 %s142, 1
    %s144 = scalar_select %p141, %s142, %s143
    %p147 = pneg %p141
    %p148 = scmp.eq.s32.totalorder %s12, 1
    %p149 = por %p147, %p148
    %p150 = scmp.ne.s32.totalorder %s142, %s145
    %p151 = scmp.eq.s32.totalorder %s12, 0
    %p152 = por %p150, %p151
    %p153 = scmp.ne.s32.totalorder %s142, %s145
    %p154 = scmp.eq.s32.totalorder %s17, 1
    %p155 = por %p153, %p154
    %p156 = scmp.ne.s32.totalorder %s145, %s146
    %p157 = scmp.eq.s32.totalorder %s17, 0
    %p158 = por %p156, %p157
    %p159 = scmp.ne.s32.totalorder %s145, %s146
    %p160 = scmp.eq.s32.totalorder %s18, 1
    %p161 = por %p159, %p160
    %p163 = scmp.ne.s32.totalorder %s146, %s162
    %p164 = scmp.eq.s32.totalorder %s18, 0
    %p165 = por %p163, %p164
    %s166 = ssub.s32 %s19, %s31
    %p167 = scmp.eq.s32.totalorder %s166, 0
    %s169 = sadd.s32 %s168, 1
    %s170 = scalar_select %p167, %s168, %s169
    %p173 = pneg %p167
    %p174 = scmp.eq.s32.totalorder %s12, 1
    %p175 = por %p173, %p174
    %p176 = scmp.ne.s32.totalorder %s168, %s171
    %p177 = scmp.eq.s32.totalorder %s12, 0
    %p178 = por %p176, %p177
    %p179 = scmp.ne.s32.totalorder %s168, %s171
    %p180 = scmp.eq.s32.totalorder %s17, 1
    %p181 = por %p179, %p180
    %p182 = scmp.ne.s32.totalorder %s171, %s172
    %p183 = scmp.eq.s32.totalorder %s17, 0
    %p184 = por %p182, %p183
    %p185 = scmp.ne.s32.totalorder %s171, %s172
    %p186 = scmp.eq.s32.totalorder %s18, 1
    %p187 = por %p185, %p186
    %p189 = scmp.ne.s32.totalorder %s172, %s188
    %p190 = scmp.eq.s32.totalorder %s18, 0
    %p191 = por %p189, %p190
    %p192 = scmp.le.s32.totalorder 1, %s12
    %p193 = scmp.lt.s32.totalorder %s12, 3
    %p194 = pnand %p192, %p193
    %p195 = pneg %p194
    // Predicated region
    $region9: #{spectral_gating_forward.2} parent=5 // pred_check
      _
    $region10: #{spectral_gating_forward.2} parent=5 // pred_check_branch
      %197 = sbr.rel (%p194) target = $region12
    $region11: #{spectral_gating_forward.2} parent=5 // pred_region
      %s198 = ssub.s32 %s12, 1
    $region12: #{spectral_gating_forward.2} parent=5 // pred_fallthru
      _
    %p199 = scmp.lt.s32.totalorder %s12, 2
    // Predicated region
    $region13: #{spectral_gating_forward.2} parent=5 // pred_check
      %p200 = pneg %p199
    $region14: #{spectral_gating_forward.2} parent=5 // pred_check_branch
      %202 = sbr.rel (%p200) target = $region16
    $region15: #{spectral_gating_forward.2} parent=5 // pred_region
      // Predicated region
      $region17: #{spectral_gating_forward.2} parent=15 // pred_check
        %p203 = pneg %p46
      $region18: #{spectral_gating_forward.2} parent=15 // pred_check_branch
        %205 = sbr.rel (%p203) target = $region20
      $region19: #{spectral_gating_forward.2} parent=15 // pred_region
        %s206 = smul.u32 2, %s20
        %p207 = scmp.lt.s32.totalorder %s19, 1
        %s208 = scalar_select %p207, %s19, 1
        %p209 = scmp.lt.s32.totalorder %s206, 1
        %s210 = scalar_select %p209, %s206, 1
        %s211 = smul.addr %s208, 4
        %s212 = sadd.s32 %s210, %s211
        %s213 = smul.addr %s212, 4
        %s214 = scalar_lea.vmem %s0, %s213
        %s215 = smul.u32 2, %s20
      $region20: #{spectral_gating_forward.2} parent=15 // pred_fallthru
        _
      // Predicated region
      $region21: #{spectral_gating_forward.2} parent=15 // pred_check
        %p216 = pneg %p74
      $region22: #{spectral_gating_forward.2} parent=15 // pred_check_branch
        %218 = sbr.rel (%p216) target = $region24
      $region23: #{spectral_gating_forward.2} parent=15 // pred_region
        %s219 = smul.u32 2, %s20
        %p220 = scmp.lt.s32.totalorder %s19, 1
        %s221 = scalar_select %p220, %s19, 1
        %p222 = scmp.lt.s32.totalorder %s219, 1
        %s223 = scalar_select %p222, %s219, 1
        %s224 = smul.addr %s221, 4
        %s225 = sadd.s32 %s223, %s224
        %s226 = smul.addr %s225, 4
        %s227 = scalar_lea.vmem %s1, %s226
        %s228 = smul.u32 2, %s20
      $region24: #{spectral_gating_forward.2} parent=15 // pred_fallthru
        _
    $region16: #{spectral_gating_forward.2} parent=5 // pred_fallthru
      _
    %p229 = scmp.le.s32.totalorder 1, %s12
    %p230 = scmp.lt.s32.totalorder %s12, 3
    %p231 = pnand %p229, %p230
    %p232 = pneg %p231
    // Predicated region
    $region25: #{spectral_gating_forward.2} parent=5 // pred_check
      _
    $region26: #{spectral_gating_forward.2} parent=5 // pred_check_branch
      %234 = sbr.rel (%p231) target = $region28
    $region27: #{spectral_gating_forward.2} parent=5 // pred_region
      %s235 = ssub.s32 %s12, 1
      %s236 = smul.u32 2, %s22
      %p237 = scmp.lt.s32.totalorder %s21, 1
      %s238 = scalar_select %p237, %s21, 1
      %p239 = scmp.lt.s32.totalorder %s236, 1
      %s240 = scalar_select %p239, %s236, 1
      %s241 = smul.addr %s238, 4
      %s242 = sadd.s32 %s240, %s241
      %s243 = smul.addr %s242, 4
      %s244 = scalar_lea.vmem %s0, %s243
      %p245 = pneg %p52
      %p246 = pneg %p49
      %s247 = smul.u32 2, %s22
      %p248 = scmp.lt.s32.totalorder %s21, 1
      %s249 = scalar_select %p248, %s21, 1
      %p250 = scmp.lt.s32.totalorder %s247, 1
      %s251 = scalar_select %p250, %s247, 1
      %s252 = smul.addr %s249, 4
      %s253 = sadd.s32 %s251, %s252
      %s254 = smul.addr %s253, 4
      %s255 = scalar_lea.vmem %s1, %s254
      %p256 = pneg %p80
      %p257 = pneg %p77
      %p258 = pneg %p106
      %p259 = pneg %p103
      %p260 = scmp.lt.s32.totalorder %s21, 1
      %s261 = scalar_select %p260, %s21, 1
      %s262 = smul.addr %s261, 2
      %s263 = smul.addr %s262, 8
      %s264 = scalar_lea.vmem %s2, %s263
      %p265 = pneg %p132
      %p266 = pneg %p129
      %p267 = scmp.lt.s32.totalorder %s21, 1
      %s268 = scalar_select %p267, %s21, 1
      %s269 = smul.addr %s268, 2
      %s270 = smul.addr %s269, 8
      %s271 = scalar_lea.vmem %s3, %s270
      %p272 = pneg %p158
      %p273 = pneg %p155
      %p274 = scmp.lt.s32.totalorder %s21, 1
      %s275 = scalar_select %p274, %s21, 1
      %s276 = smul.addr %s275, 2
      %s277 = smul.addr %s276, 8
      %s278 = scalar_lea.vmem %s4, %s277
      %p279 = pneg %p184
      %p280 = pneg %p181
      %p281 = scmp.lt.s32.totalorder %s21, 1
      %s282 = scalar_select %p281, %s21, 1
      %s283 = smul.addr %s282, 2
      %s284 = smul.addr %s283, 8
      %s285 = scalar_lea.vmem %s5, %s284
      %s286 = smul.u32 2, %s22
      %p287 = scmp.lt.s32.totalorder %s21, 1
      %s288 = scalar_select %p287, %s21, 1
      %p289 = scmp.lt.s32.totalorder %s286, 1
      %s290 = scalar_select %p289, %s286, 1
      %s291 = smul.addr %s288, 4
      %s292 = sadd.s32 %s290, %s291
      %s293 = smul.addr %s292, 4
      %s294 = scalar_lea.vmem %s0, %s293
      %s295 = smul.u32 2, %s22
      %s296 = smul.u32 2, %s22
      %p297 = scmp.lt.s32.totalorder %s21, 1
      %s298 = scalar_select %p297, %s21, 1
      %p299 = scmp.lt.s32.totalorder %s296, 1
      %s300 = scalar_select %p299, %s296, 1
      %s301 = smul.addr %s298, 4
      %s302 = sadd.s32 %s300, %s301
      %s303 = smul.addr %s302, 4
      %s304 = scalar_lea.vmem %s1, %s303
      %s305 = smul.u32 2, %s22
      %p306 = scmp.lt.s32.totalorder %s21, 1
      %s307 = scalar_select %p306, %s21, 1
      %s308 = smul.addr %s307, 2
      %s309 = smul.addr %s308, 8
      %s310 = scalar_lea.vmem %s2, %s309
      %p311 = scmp.lt.s32.totalorder %s21, 1
      %s312 = scalar_select %p311, %s21, 1
      %s313 = smul.addr %s312, 2
      %s314 = smul.addr %s313, 8
      %s315 = scalar_lea.vmem %s3, %s314
      %p316 = scmp.lt.s32.totalorder %s21, 1
      %s317 = scalar_select %p316, %s21, 1
      %s318 = smul.addr %s317, 2
      %s319 = smul.addr %s318, 8
      %s320 = scalar_lea.vmem %s4, %s319
      %p321 = scmp.lt.s32.totalorder %s21, 1
      %s322 = scalar_select %p321, %s21, 1
      %s323 = smul.addr %s322, 2
      %s324 = smul.addr %s323, 8
      %s325 = scalar_lea.vmem %s5, %s324
      %p328 = scmp.eq.s32.totalorder %s22, 0
      // Predicated region
      $region29: #{spectral_gating_forward.2} parent=27 // pred_check
        %p329 = pneg %p328
      $region30: #{spectral_gating_forward.2} parent=27 // pred_check_branch
        %331 = sbr.rel (%p329) target = $region32
      $region31: #{spectral_gating_forward.2} parent=27 // pred_region
        %vm332 = vcmask 130048
        %333 = vst.msk [vmem:[%s310] sm:$0xff] %vm332, 0.0
        %334 = vst.msk [vmem:[%s310 + $0x8] sm:$0xff] %vm332, 0.0
        %335 = vst.msk [vmem:[%s315] sm:$0xff] %vm332, 0.0
        %336 = vst.msk [vmem:[%s315 + $0x8] sm:$0xff] %vm332, 0.0
        %vm337 = vcmask 7168
        %338 = vst.msk [vmem:[%s320] sm:$0xff] %vm337, 0.0
        %339 = vst.msk [vmem:[%s320 + $0x8] sm:$0xff] %vm337, 0.0
        %340 = vst.msk [vmem:[%s325] sm:$0xff] %vm337, 0.0
        %341 = vst.msk [vmem:[%s325 + $0x8] sm:$0xff] %vm337, 0.0
      $region32: #{spectral_gating_forward.2} parent=27 // pred_fallthru
        _
      %v342 = vld [vmem:[%s294] sm:$0xff]
      %v343 = vld [vmem:[%s294 + $0x8] sm:$0xff]
      %v344 = vld [vmem:[%s304] sm:$0xff]
      %v345 = vld [vmem:[%s304 + $0x8] sm:$0xff]
      %v346 = vld [vmem:[%s310] sm:$0xff]
      %v347 = vld [vmem:[%s310 + $0x8] sm:$0xff]
      %v350 = vunpack.c.l.b16 %v342
      %v351 = vunpack.c.h.b16 %v342
      %v352 = vunpack.c.l.b16 %v343
      %v353 = vunpack.c.h.b16 %v343
      %v354 = vpack.c.b16 %v352, %v350
      %v355 = vpack.c.b16 %v353, %v351
      %358 = vmatprep.subr.bf16.mxu0 0
      %359 = vmatpush1.bf16.xpose.msra.mxu0 0
      %360 = vmatprep.subr.bf16.mxu0 0
      %361 = vmatpush1.bf16.xpose.msra.mxu0 0
      %362 = vmatprep.subr.bf16.mxu0 0
      %363 = vmatpush1.bf16.xpose.msra.mxu0 0
      %364 = vmatprep.subr.bf16.mxu0 0
      %365 = vmatpush1.bf16.xpose.msra.mxu0 0
      %366 = vmatprep.subr.bf16.mxu0 0
      %367 = vmatpush1.bf16.xpose.msra.mxu0 0
      %368 = vmatprep.subr.bf16.mxu0 0
      %369 = vmatpush1.bf16.xpose.msra.mxu0 0
      %370 = vmatprep.subr.bf16.mxu0 0
      %371 = vmatpush1.bf16.xpose.msra.mxu0 0
      %372 = vmatprep.subr.bf16.mxu0 %v355
      %373 = vmatpush1.bf16.xpose.msra.mxu0 %v354
      %374 = vmatprep.subr.bf16.mxu0 0
      %375 = vmatpush2.bf16.xpose.msra.mxu0 0
      %376 = vmatprep.subr.bf16.mxu0 0
      %377 = vmatpush2.bf16.xpose.msra.mxu0 0
      %378 = vmatprep.subr.bf16.mxu0 0
      %379 = vmatpush2.bf16.xpose.msra.mxu0 0
      %380 = vmatprep.subr.bf16.mxu0 0
      %381 = vmatpush2.bf16.xpose.msra.mxu0 0
      %382 = vmatprep.subr.bf16.mxu0 0
      %383 = vmatpush2.bf16.xpose.msra.mxu0 0
      %384 = vmatprep.subr.bf16.mxu0 0
      %385 = vmatpush2.bf16.xpose.msra.mxu0 0
      %386 = vmatprep.subr.bf16.mxu0 0
      %387 = vmatpush2.bf16.xpose.msra.mxu0 0
      %388 = vmatprep.subr.bf16.mxu0 0
      %389 = vmatpush2.bf16.xpose.msra.mxu0 0
      %390 = vmatprep.mubr.bf16.mxu0 %v355
      %391 = vmatmul.mubr.bf16.gmra.mxu0 %v354
      %v392 = vpop.f32.mrf.mxu0
      %v393 = vadd.f32 0.0, %v392
      %v394 = vpop.f32.mrf.mxu0
      %v395 = vpop.f32.mrf.mxu0
      %v396 = vadd.f32 0.0, %v395
      %v397 = vpop.f32.mrf.mxu0
      %398 = vdwg.mxu0
      %v399 = vadd.f32 %v346, %v393
      %v400 = vadd.f32 %v347, %v396
      %vm401 = vcmask 130048
      %402 = vst.msk [vmem:[%s310] sm:$0xff] %vm401, %v399
      %403 = vst.msk [vmem:[%s310 + $0x8] sm:$0xff] %vm401, %v400
      %v404 = vld [vmem:[%s315] sm:$0xff]
      %v405 = vld [vmem:[%s315 + $0x8] sm:$0xff]
      %v408 = vunpack.c.l.b16 %v344
      %v409 = vunpack.c.h.b16 %v344
      %v410 = vunpack.c.l.b16 %v345
      %v411 = vunpack.c.h.b16 %v345
      %v412 = vpack.c.b16 %v410, %v408
      %v413 = vpack.c.b16 %v411, %v409
      %416 = vmatprep.subr.bf16.mxu0 0
      %417 = vmatpush1.bf16.xpose.msra.mxu0 0
      %418 = vmatprep.subr.bf16.mxu0 0
      %419 = vmatpush1.bf16.xpose.msra.mxu0 0
      %420 = vmatprep.subr.bf16.mxu0 0
      %421 = vmatpush1.bf16.xpose.msra.mxu0 0
      %422 = vmatprep.subr.bf16.mxu0 0
      %423 = vmatpush1.bf16.xpose.msra.mxu0 0
      %424 = vmatprep.subr.bf16.mxu0 0
      %425 = vmatpush1.bf16.xpose.msra.mxu0 0
      %426 = vmatprep.subr.bf16.mxu0 0
      %427 = vmatpush1.bf16.xpose.msra.mxu0 0
      %428 = vmatprep.subr.bf16.mxu0 0
      %429 = vmatpush1.bf16.xpose.msra.mxu0 0
      %430 = vmatprep.subr.bf16.mxu0 %v413
      %431 = vmatpush1.bf16.xpose.msra.mxu0 %v412
      %432 = vmatprep.subr.bf16.mxu0 0
      %433 = vmatpush2.bf16.xpose.msra.mxu0 0
      %434 = vmatprep.subr.bf16.mxu0 0
      %435 = vmatpush2.bf16.xpose.msra.mxu0 0
      %436 = vmatprep.subr.bf16.mxu0 0
      %437 = vmatpush2.bf16.xpose.msra.mxu0 0
      %438 = vmatprep.subr.bf16.mxu0 0
      %439 = vmatpush2.bf16.xpose.msra.mxu0 0
      %440 = vmatprep.subr.bf16.mxu0 0
      %441 = vmatpush2.bf16.xpose.msra.mxu0 0
      %442 = vmatprep.subr.bf16.mxu0 0
      %443 = vmatpush2.bf16.xpose.msra.mxu0 0
      %444 = vmatprep.subr.bf16.mxu0 0
      %445 = vmatpush2.bf16.xpose.msra.mxu0 0
      %446 = vmatprep.subr.bf16.mxu0 0
      %447 = vmatpush2.bf16.xpose.msra.mxu0 0
      %448 = vmatprep.mubr.bf16.mxu0 %v413
      %449 = vmatmul.mubr.bf16.gmra.mxu0 %v412
      %v450 = vpop.f32.mrf.mxu0
      %v451 = vadd.f32 0.0, %v450
      %v452 = vpop.f32.mrf.mxu0
      %v453 = vpop.f32.mrf.mxu0
      %v454 = vadd.f32 0.0, %v453
      %v455 = vpop.f32.mrf.mxu0
      %456 = vdwg.mxu0
      %v457 = vadd.f32 %v404, %v451
      %v458 = vadd.f32 %v405, %v454
      %459 = vst.msk [vmem:[%s315] sm:$0xff] %vm401, %v457
      %460 = vst.msk [vmem:[%s315 + $0x8] sm:$0xff] %vm401, %v458
      %v461 = vld [vmem:[%s320] sm:$0xff]
      %v462 = vld [vmem:[%s320 + $0x8] sm:$0xff]
      %463 = vmatprep.subr.bf16.mxu0 0
      %464 = vmatpush1.bf16.msra.mxu0 1065369472
      %465 = vmatprep.subr.bf16.mxu0 0
      %466 = vmatpush1.bf16.msra.mxu0 1065369472
      %467 = vmatprep.subr.bf16.mxu0 0
      %468 = vmatpush1.bf16.msra.mxu0 1065369472
      %469 = vmatprep.subr.bf16.mxu0 0
      %470 = vmatpush1.bf16.msra.mxu0 1065369472
      %471 = vmatprep.subr.bf16.mxu0 0
      %472 = vmatpush1.bf16.msra.mxu0 1065369472
      %473 = vmatprep.subr.bf16.mxu0 0
      %474 = vmatpush1.bf16.msra.mxu0 1065369472
      %475 = vmatprep.subr.bf16.mxu0 0
      %476 = vmatpush1.bf16.msra.mxu0 1065369472
      %477 = vmatprep.subr.bf16.mxu0 0
      %478 = vmatpush1.bf16.msra.mxu0 1065369472
      %479 = vmatprep.subr.bf16.mxu0 0
      %480 = vmatpush2.bf16.msra.mxu0 1065369472
      %481 = vmatprep.subr.bf16.mxu0 0
      %482 = vmatpush2.bf16.msra.mxu0 1065369472
      %483 = vmatprep.subr.bf16.mxu0 0
      %484 = vmatpush2.bf16.msra.mxu0 1065369472
      %485 = vmatprep.subr.bf16.mxu0 0
      %486 = vmatpush2.bf16.msra.mxu0 1065369472
      %487 = vmatprep.subr.bf16.mxu0 0
      %488 = vmatpush2.bf16.msra.mxu0 1065369472
      %489 = vmatprep.subr.bf16.mxu0 0
      %490 = vmatpush2.bf16.msra.mxu0 1065369472
      %491 = vmatprep.subr.bf16.mxu0 0
      %492 = vmatpush2.bf16.msra.mxu0 1065369472
      %493 = vmatprep.subr.bf16.mxu0 0
      %494 = vmatpush2.bf16.msra.mxu0 1065369472
      %495 = vmatprep.mubr.bf16.mxu0 %v355
      %496 = vmatmul.mubr.bf16.gmra.mxu0 %v354
      %v497 = vpop.f32.mrf.mxu0
      %v498 = vadd.f32 0.0, %v497
      %v499 = vpop.f32.mrf.mxu0
      %v500 = vpop.f32.mrf.mxu0
      %v501 = vadd.f32 0.0, %v500
      %v502 = vpop.f32.mrf.mxu0
      %503 = vdwg.mxu0
      %v504 = vadd.f32 %v461, %v498
      %v505 = vadd.f32 %v462, %v501
      %vm506 = vcmask 7168
      %507 = vst.msk [vmem:[%s320] sm:$0xff] %vm506, %v504
      %508 = vst.msk [vmem:[%s320 + $0x8] sm:$0xff] %vm506, %v505
      %v509 = vld [vmem:[%s325] sm:$0xff]
      %v510 = vld [vmem:[%s325 + $0x8] sm:$0xff]
      %511 = vmatprep.subr.bf16.mxu0 0
      %512 = vmatpush1.bf16.msra.mxu0 1065369472
      %513 = vmatprep.subr.bf16.mxu0 0
      %514 = vmatpush1.bf16.msra.mxu0 1065369472
      %515 = vmatprep.subr.bf16.mxu0 0
      %516 = vmatpush1.bf16.msra.mxu0 1065369472
      %517 = vmatprep.subr.bf16.mxu0 0
      %518 = vmatpush1.bf16.msra.mxu0 1065369472
      %519 = vmatprep.subr.bf16.mxu0 0
      %520 = vmatpush1.bf16.msra.mxu0 1065369472
      %521 = vmatprep.subr.bf16.mxu0 0
      %522 = vmatpush1.bf16.msra.mxu0 1065369472
      %523 = vmatprep.subr.bf16.mxu0 0
      %524 = vmatpush1.bf16.msra.mxu0 1065369472
      %525 = vmatprep.subr.bf16.mxu0 0
      %526 = vmatpush1.bf16.msra.mxu0 1065369472
      %527 = vmatprep.subr.bf16.mxu0 0
      %528 = vmatpush2.bf16.msra.mxu0 1065369472
      %529 = vmatprep.subr.bf16.mxu0 0
      %530 = vmatpush2.bf16.msra.mxu0 1065369472
      %531 = vmatprep.subr.bf16.mxu0 0
      %532 = vmatpush2.bf16.msra.mxu0 1065369472
      %533 = vmatprep.subr.bf16.mxu0 0
      %534 = vmatpush2.bf16.msra.mxu0 1065369472
      %535 = vmatprep.subr.bf16.mxu0 0
      %536 = vmatpush2.bf16.msra.mxu0 1065369472
      %537 = vmatprep.subr.bf16.mxu0 0
      %538 = vmatpush2.bf16.msra.mxu0 1065369472
      %539 = vmatprep.subr.bf16.mxu0 0
      %540 = vmatpush2.bf16.msra.mxu0 1065369472
      %541 = vmatprep.subr.bf16.mxu0 0
      %542 = vmatpush2.bf16.msra.mxu0 1065369472
      %543 = vmatprep.mubr.bf16.mxu0 %v413
      %544 = vmatmul.mubr.bf16.gmra.mxu0 %v412
      %v545 = vpop.f32.mrf.mxu0
      %v546 = vadd.f32 0.0, %v545
      %v547 = vpop.f32.mrf.mxu0
      %v548 = vpop.f32.mrf.mxu0
      %v549 = vadd.f32 0.0, %v548
      %v550 = vpop.f32.mrf.mxu0
      %551 = vdwg.mxu0
      %v552 = vadd.f32 %v509, %v546
      %v553 = vadd.f32 %v510, %v549
      %554 = vst.msk [vmem:[%s325] sm:$0xff] %vm506, %v552
      %555 = vst.msk [vmem:[%s325 + $0x8] sm:$0xff] %vm506, %v553
      %p556 = scmp.lt.s32.totalorder %s21, 1
      %s557 = scalar_select %p556, %s21, 1
      %s558 = smul.addr %s557, 2
      %s559 = smul.addr %s558, 8
      %s560 = scalar_lea.vmem %s2, %s559
      %p561 = scmp.lt.s32.totalorder %s21, 1
      %s562 = scalar_select %p561, %s21, 1
      %s563 = smul.addr %s562, 2
      %s564 = smul.addr %s563, 8
      %s565 = scalar_lea.vmem %s3, %s564
      %p566 = scmp.lt.s32.totalorder %s21, 1
      %s567 = scalar_select %p566, %s21, 1
      %s568 = smul.addr %s567, 2
      %s569 = smul.addr %s568, 8
      %s570 = scalar_lea.vmem %s4, %s569
      %p571 = scmp.lt.s32.totalorder %s21, 1
      %s572 = scalar_select %p571, %s21, 1
      %s573 = smul.addr %s572, 2
      %s574 = smul.addr %s573, 8
      %s575 = scalar_lea.vmem %s5, %s574
      // Predicated region
      $region33: #{spectral_gating_forward.2} parent=27 // pred_check
        %p576 = pneg %p103
      $region34: #{spectral_gating_forward.2} parent=27 // pred_check_branch
        %578 = sbr.rel (%p576) target = $region36
      $region35: #{spectral_gating_forward.2} parent=27 // pred_region
        _
      $region36: #{spectral_gating_forward.2} parent=27 // pred_fallthru
        _
      // Predicated region
      $region37: #{spectral_gating_forward.2} parent=27 // pred_check
        %p579 = pneg %p129
      $region38: #{spectral_gating_forward.2} parent=27 // pred_check_branch
        %581 = sbr.rel (%p579) target = $region40
      $region39: #{spectral_gating_forward.2} parent=27 // pred_region
        _
      $region40: #{spectral_gating_forward.2} parent=27 // pred_fallthru
        _
      // Predicated region
      $region41: #{spectral_gating_forward.2} parent=27 // pred_check
        %p582 = pneg %p155
      $region42: #{spectral_gating_forward.2} parent=27 // pred_check_branch
        %584 = sbr.rel (%p582) target = $region44
      $region43: #{spectral_gating_forward.2} parent=27 // pred_region
        _
      $region44: #{spectral_gating_forward.2} parent=27 // pred_fallthru
        _
      // Predicated region
      $region45: #{spectral_gating_forward.2} parent=27 // pred_check
        %p585 = pneg %p181
      $region46: #{spectral_gating_forward.2} parent=27 // pred_check_branch
        %587 = sbr.rel (%p585) target = $region48
      $region47: #{spectral_gating_forward.2} parent=27 // pred_region
        _
      $region48: #{spectral_gating_forward.2} parent=27 // pred_fallthru
        _
    $region28: #{spectral_gating_forward.2} parent=5 // pred_fallthru
      _
    %p588 = scmp.le.s32.totalorder 2, %s12
    // Predicated region
    $region49: #{spectral_gating_forward.2} parent=5 // pred_check
      %p589 = pneg %p588
    $region50: #{spectral_gating_forward.2} parent=5 // pred_check_branch
      %591 = sbr.rel (%p589) target = $region52
    $region51: #{spectral_gating_forward.2} parent=5 // pred_region
      %s592 = ssub.s32 %s12, 2
      // Predicated region
      $region53: #{spectral_gating_forward.2} parent=51 // pred_check
        %p593 = pneg %p109
      $region54: #{spectral_gating_forward.2} parent=51 // pred_check_branch
        %595 = sbr.rel (%p593) target = $region56
      $region55: #{spectral_gating_forward.2} parent=51 // pred_region
        %p596 = scmp.lt.s32.totalorder %s23, 1
        %s597 = scalar_select %p596, %s23, 1
        %s598 = smul.addr %s597, 2
        %s599 = smul.addr %s598, 8
        %s600 = scalar_lea.vmem %s2, %s599
      $region56: #{spectral_gating_forward.2} parent=51 // pred_fallthru
        _
      // Predicated region
      $region57: #{spectral_gating_forward.2} parent=51 // pred_check
        %p601 = pneg %p135
      $region58: #{spectral_gating_forward.2} parent=51 // pred_check_branch
        %603 = sbr.rel (%p601) target = $region60
      $region59: #{spectral_gating_forward.2} parent=51 // pred_region
        %p604 = scmp.lt.s32.totalorder %s23, 1
        %s605 = scalar_select %p604, %s23, 1
        %s606 = smul.addr %s605, 2
        %s607 = smul.addr %s606, 8
        %s608 = scalar_lea.vmem %s3, %s607
      $region60: #{spectral_gating_forward.2} parent=51 // pred_fallthru
        _
      // Predicated region
      $region61: #{spectral_gating_forward.2} parent=51 // pred_check
        %p609 = pneg %p161
      $region62: #{spectral_gating_forward.2} parent=51 // pred_check_branch
        %611 = sbr.rel (%p609) target = $region64
      $region63: #{spectral_gating_forward.2} parent=51 // pred_region
        %p612 = scmp.lt.s32.totalorder %s23, 1
        %s613 = scalar_select %p612, %s23, 1
        %s614 = smul.addr %s613, 2
        %s615 = smul.addr %s614, 8
        %s616 = scalar_lea.vmem %s4, %s615
      $region64: #{spectral_gating_forward.2} parent=51 // pred_fallthru
        _
      // Predicated region
      $region65: #{spectral_gating_forward.2} parent=51 // pred_check
        %p617 = pneg %p187
      $region66: #{spectral_gating_forward.2} parent=51 // pred_check_branch
        %619 = sbr.rel (%p617) target = $region68
      $region67: #{spectral_gating_forward.2} parent=51 // pred_region
        %p620 = scmp.lt.s32.totalorder %s23, 1
        %s621 = scalar_select %p620, %s23, 1
        %s622 = smul.addr %s621, 2
        %s623 = smul.addr %s622, 8
        %s624 = scalar_lea.vmem %s5, %s623
      $region68: #{spectral_gating_forward.2} parent=51 // pred_fallthru
        _
    $region52: #{spectral_gating_forward.2} parent=5 // pred_fallthru
      _
  $region6: #{spectral_gating_forward.2} parent=0 // loop_footer
    %s16 = sadd.s32 1, %s12
  $region7: #{spectral_gating_forward.2} parent=0 // loop_footer_branch
    %11 = sbr.rel target = $region3
  $region8: #{spectral_gating_forward.2} parent=0 // loop_exit
    _

// kernel: spectral_gating_forward.3
$region0: #{spectral_gating_forward.3}
  #allocation0 [shape = 'u32[]', space=smem, size = 0x4, offset = 0x4, fixed_abs, tag = 'smem constant byte address 0x4 - core index']
  #allocation1 [shape = 'u32[144,128]{1,0:T(1,128)}', space=vmem, size = 0x12000, scoped, tag = 'internal scratch']
  %s0 = inlined_call_operand.vmem [shape: bf16[2,16,256], index: 0, kind: input, shape index: {}]
  %s1 = inlined_call_operand.vmem [shape: bf16[2,16,256], index: 1, kind: input, shape index: {}]
  %s2 = inlined_call_operand.vmem [shape: bf16[16,16], index: 2, kind: input, shape index: {}]
  %s3 = inlined_call_operand.vmem [shape: bf16[16,16], index: 3, kind: input, shape index: {}]
  %s4 = inlined_call_operand.vmem [shape: f32[16,1], index: 4, kind: input, shape index: {}]
  %s5 = inlined_call_operand.vmem [shape: f32[16,1], index: 5, kind: input, shape index: {}]
  %s6 = inlined_call_operand.vmem [shape: f32[16,1], index: 6, kind: input, shape index: {}]
  %s7 = inlined_call_operand.vmem [shape: f32[16,1], index: 7, kind: input, shape index: {}]
  %s8 = inlined_call_operand.vmem [shape: bf16[16,256], index: 8, kind: input, shape index: {}]
  %s9 = inlined_call_operand.vmem [shape: bf16[16,256], index: 9, kind: input, shape index: {}]
  %s10 = inlined_call_operand.vmem [shape: bf16[2,16,256], index: 10, kind: output, shape index: {0}]
  %s11 = inlined_call_operand.vmem [shape: bf16[2,16,256], index: 11, kind: output, shape index: {1}]
  %12 = xla_tuple %s10, %s11
  %s13 = sld [smem:[#allocation0]]
  $region81: #{spectral_gating_forward.3} parent=0
    _
  %s15 = ssub.s32 1, %s13
  %s16 = scalar_select 0, %s15, %s13
  loop: start=0, step=1, limit=4
  $region2: #{spectral_gating_forward.3} parent=0 // loop_pre_header
    _
  $region3: #{spectral_gating_forward.3} parent=0 // loop_header
    %s18 = sphi 0, %s22
    %p19 = scmp.ge.s32.totalorder %s18, 4
    %s25 = sphi 0, %s37
    %s26 = sphi 0, %s33
    %s27 = sphi 0, %s25
    %s28 = sphi 0, %s26
    %s29 = sphi 0, %s27
    %s30 = sphi 0, %s28
    %s42 = sphi 0, %s44
    %s45 = sphi 0, %s42
    %s46 = sphi 0, %s45
    %s62 = sphi 0, %s46
    %s70 = sphi 0, %s72
    %s73 = sphi 0, %s70
    %s74 = sphi 0, %s73
    %s90 = sphi 0, %s74
    %s94 = sphi 0, %s94
    %s96 = sphi 0, %s94
    %s97 = sphi 0, %s96
    %s111 = sphi 0, %s97
    %s115 = sphi 0, %s115
    %s117 = sphi 0, %s115
    %s118 = sphi 0, %s117
    %s132 = sphi 0, %s118
    %s136 = sphi 0, %s136
    %s138 = sphi 0, %s136
    %s139 = sphi 0, %s138
    %s153 = sphi 0, %s139
    %s157 = sphi 0, %s157
    %s159 = sphi 0, %s157
    %s160 = sphi 0, %s159
    %s174 = sphi 0, %s160
    %s178 = sphi 0, %s178
    %s180 = sphi 0, %s178
    %s181 = sphi 0, %s180
    %s195 = sphi 0, %s181
    %s199 = sphi 0, %s199
    %s201 = sphi 0, %s199
    %s202 = sphi 0, %s201
    %s216 = sphi 0, %s202
    %s222 = sphi 0, %s224
    %s225 = sphi 0, %s222
    %s226 = sphi 0, %s225
    %s242 = sphi 0, %s226
    %s248 = sphi 0, %s250
    %s251 = sphi 0, %s248
    %s252 = sphi 0, %s251
    %s268 = sphi 0, %s252
    %s276 = sphi 0, %s278
    %s279 = sphi 0, %s276
    %s280 = sphi 0, %s279
    %s296 = sphi 0, %s280
    %s304 = sphi 0, %s306
    %s307 = sphi 0, %s304
    %s308 = sphi 0, %s307
    %s324 = sphi 0, %s308
  $region4: #{spectral_gating_forward.3} parent=0 // loop_header_branch
    %21 = sbr.rel (%p19) target = $region8
  $region5: #{spectral_gating_forward.3} parent=0 // loop_body
    %s23 = ssub.s32 %s18, 1
    %s24 = ssub.s32 %s18, 2
    %s31 = sadd.s32 1, %s26
    %p32 = scmp.ge.s32.totalorder %s31, 1
    %s33 = scalar_select %p32, 0, %s31
    %s34 = sadd.s32 1, %s25
    %s35 = scalar_select %p32, %s34, %s25
    %p36 = scmp.ge.s32.totalorder %s35, 2
    %s37 = scalar_select %p36, 0, %s35
    %s38 = ssub.s32 %s25, %s37
    %s39 = ssub.s32 %s26, %s33
    %s40 = sor.u32 %s38, %s39
    %p41 = scmp.eq.s32.totalorder %s40, 0
    %s43 = sadd.s32 %s42, 1
    %s44 = scalar_select %p41, %s42, %s43
    %p47 = pneg %p41
    %p48 = scmp.eq.s32.totalorder %s18, 1
    %p49 = por %p47, %p48
    %p50 = scmp.ne.s32.totalorder %s42, %s45
    %p51 = scmp.eq.s32.totalorder %s18, 0
    %p52 = por %p50, %p51
    %p53 = scmp.ne.s32.totalorder %s42, %s45
    %p54 = scmp.eq.s32.totalorder %s23, 1
    %p55 = por %p53, %p54
    %p56 = scmp.ne.s32.totalorder %s45, %s46
    %p57 = scmp.eq.s32.totalorder %s23, 0
    %p58 = por %p56, %p57
    %p59 = scmp.ne.s32.totalorder %s45, %s46
    %p60 = scmp.eq.s32.totalorder %s24, 1
    %p61 = por %p59, %p60
    %p63 = scmp.ne.s32.totalorder %s46, %s62
    %p64 = scmp.eq.s32.totalorder %s24, 0
    %p65 = por %p63, %p64
    %s66 = ssub.s32 %s25, %s37
    %s67 = ssub.s32 %s26, %s33
    %s68 = sor.u32 %s66, %s67
    %p69 = scmp.eq.s32.totalorder %s68, 0
    %s71 = sadd.s32 %s70, 1
    %s72 = scalar_select %p69, %s70, %s71
    %p75 = pneg %p69
    %p76 = scmp.eq.s32.totalorder %s18, 1
    %p77 = por %p75, %p76
    %p78 = scmp.ne.s32.totalorder %s70, %s73
    %p79 = scmp.eq.s32.totalorder %s18, 0
    %p80 = por %p78, %p79
    %p81 = scmp.ne.s32.totalorder %s70, %s73
    %p82 = scmp.eq.s32.totalorder %s23, 1
    %p83 = por %p81, %p82
    %p84 = scmp.ne.s32.totalorder %s73, %s74
    %p85 = scmp.eq.s32.totalorder %s23, 0
    %p86 = por %p84, %p85
    %p87 = scmp.ne.s32.totalorder %s73, %s74
    %p88 = scmp.eq.s32.totalorder %s24, 1
    %p89 = por %p87, %p88
    %p91 = scmp.ne.s32.totalorder %s74, %s90
    %p92 = scmp.eq.s32.totalorder %s24, 0
    %p93 = por %p91, %p92
    %s95 = sadd.s32 %s94, 1
    %p98 = scmp.eq.s32.totalorder %s18, 1
    %p99 = scmp.ne.s32.totalorder %s94, %s96
    %p100 = scmp.eq.s32.totalorder %s18, 0
    %p101 = por %p99, %p100
    %p102 = scmp.ne.s32.totalorder %s94, %s96
    %p103 = scmp.eq.s32.totalorder %s23, 1
    %p104 = por %p102, %p103
    %p105 = scmp.ne.s32.totalorder %s96, %s97
    %p106 = scmp.eq.s32.totalorder %s23, 0
    %p107 = por %p105, %p106
    %p108 = scmp.ne.s32.totalorder %s96, %s97
    %p109 = scmp.eq.s32.totalorder %s24, 1
    %p110 = por %p108, %p109
    %p112 = scmp.ne.s32.totalorder %s97, %s111
    %p113 = scmp.eq.s32.totalorder %s24, 0
    %p114 = por %p112, %p113
    %s116 = sadd.s32 %s115, 1
    %p119 = scmp.eq.s32.totalorder %s18, 1
    %p120 = scmp.ne.s32.totalorder %s115, %s117
    %p121 = scmp.eq.s32.totalorder %s18, 0
    %p122 = por %p120, %p121
    %p123 = scmp.ne.s32.totalorder %s115, %s117
    %p124 = scmp.eq.s32.totalorder %s23, 1
    %p125 = por %p123, %p124
    %p126 = scmp.ne.s32.totalorder %s117, %s118
    %p127 = scmp.eq.s32.totalorder %s23, 0
    %p128 = por %p126, %p127
    %p129 = scmp.ne.s32.totalorder %s117, %s118
    %p130 = scmp.eq.s32.totalorder %s24, 1
    %p131 = por %p129, %p130
    %p133 = scmp.ne.s32.totalorder %s118, %s132
    %p134 = scmp.eq.s32.totalorder %s24, 0
    %p135 = por %p133, %p134
    %s137 = sadd.s32 %s136, 1
    %p140 = scmp.eq.s32.totalorder %s18, 1
    %p141 = scmp.ne.s32.totalorder %s136, %s138
    %p142 = scmp.eq.s32.totalorder %s18, 0
    %p143 = por %p141, %p142
    %p144 = scmp.ne.s32.totalorder %s136, %s138
    %p145 = scmp.eq.s32.totalorder %s23, 1
    %p146 = por %p144, %p145
    %p147 = scmp.ne.s32.totalorder %s138, %s139
    %p148 = scmp.eq.s32.totalorder %s23, 0
    %p149 = por %p147, %p148
    %p150 = scmp.ne.s32.totalorder %s138, %s139
    %p151 = scmp.eq.s32.totalorder %s24, 1
    %p152 = por %p150, %p151
    %p154 = scmp.ne.s32.totalorder %s139, %s153
    %p155 = scmp.eq.s32.totalorder %s24, 0
    %p156 = por %p154, %p155
    %s158 = sadd.s32 %s157, 1
    %p161 = scmp.eq.s32.totalorder %s18, 1
    %p162 = scmp.ne.s32.totalorder %s157, %s159
    %p163 = scmp.eq.s32.totalorder %s18, 0
    %p164 = por %p162, %p163
    %p165 = scmp.ne.s32.totalorder %s157, %s159
    %p166 = scmp.eq.s32.totalorder %s23, 1
    %p167 = por %p165, %p166
    %p168 = scmp.ne.s32.totalorder %s159, %s160
    %p169 = scmp.eq.s32.totalorder %s23, 0
    %p170 = por %p168, %p169
    %p171 = scmp.ne.s32.totalorder %s159, %s160
    %p172 = scmp.eq.s32.totalorder %s24, 1
    %p173 = por %p171, %p172
    %p175 = scmp.ne.s32.totalorder %s160, %s174
    %p176 = scmp.eq.s32.totalorder %s24, 0
    %p177 = por %p175, %p176
    %s179 = sadd.s32 %s178, 1
    %p182 = scmp.eq.s32.totalorder %s18, 1
    %p183 = scmp.ne.s32.totalorder %s178, %s180
    %p184 = scmp.eq.s32.totalorder %s18, 0
    %p185 = por %p183, %p184
    %p186 = scmp.ne.s32.totalorder %s178, %s180
    %p187 = scmp.eq.s32.totalorder %s23, 1
    %p188 = por %p186, %p187
    %p189 = scmp.ne.s32.totalorder %s180, %s181
    %p190 = scmp.eq.s32.totalorder %s23, 0
    %p191 = por %p189, %p190
    %p192 = scmp.ne.s32.totalorder %s180, %s181
    %p193 = scmp.eq.s32.totalorder %s24, 1
    %p194 = por %p192, %p193
    %p196 = scmp.ne.s32.totalorder %s181, %s195
    %p197 = scmp.eq.s32.totalorder %s24, 0
    %p198 = por %p196, %p197
    %s200 = sadd.s32 %s199, 1
    %p203 = scmp.eq.s32.totalorder %s18, 1
    %p204 = scmp.ne.s32.totalorder %s199, %s201
    %p205 = scmp.eq.s32.totalorder %s18, 0
    %p206 = por %p204, %p205
    %p207 = scmp.ne.s32.totalorder %s199, %s201
    %p208 = scmp.eq.s32.totalorder %s23, 1
    %p209 = por %p207, %p208
    %p210 = scmp.ne.s32.totalorder %s201, %s202
    %p211 = scmp.eq.s32.totalorder %s23, 0
    %p212 = por %p210, %p211
    %p213 = scmp.ne.s32.totalorder %s201, %s202
    %p214 = scmp.eq.s32.totalorder %s24, 1
    %p215 = por %p213, %p214
    %p217 = scmp.ne.s32.totalorder %s202, %s216
    %p218 = scmp.eq.s32.totalorder %s24, 0
    %p219 = por %p217, %p218
    %s220 = ssub.s32 %s26, %s33
    %p221 = scmp.eq.s32.totalorder %s220, 0
    %s223 = sadd.s32 %s222, 1
    %s224 = scalar_select %p221, %s222, %s223
    %p227 = pneg %p221
    %p228 = scmp.eq.s32.totalorder %s18, 1
    %p229 = por %p227, %p228
    %p230 = scmp.ne.s32.totalorder %s222, %s225
    %p231 = scmp.eq.s32.totalorder %s18, 0
    %p232 = por %p230, %p231
    %p233 = scmp.ne.s32.totalorder %s222, %s225
    %p234 = scmp.eq.s32.totalorder %s23, 1
    %p235 = por %p233, %p234
    %p236 = scmp.ne.s32.totalorder %s225, %s226
    %p237 = scmp.eq.s32.totalorder %s23, 0
    %p238 = por %p236, %p237
    %p239 = scmp.ne.s32.totalorder %s225, %s226
    %p240 = scmp.eq.s32.totalorder %s24, 1
    %p241 = por %p239, %p240
    %p243 = scmp.ne.s32.totalorder %s226, %s242
    %p244 = scmp.eq.s32.totalorder %s24, 0
    %p245 = por %p243, %p244
    %s246 = ssub.s32 %s26, %s33
    %p247 = scmp.eq.s32.totalorder %s246, 0
    %s249 = sadd.s32 %s248, 1
    %s250 = scalar_select %p247, %s248, %s249
    %p253 = pneg %p247
    %p254 = scmp.eq.s32.totalorder %s18, 1
    %p255 = por %p253, %p254
    %p256 = scmp.ne.s32.totalorder %s248, %s251
    %p257 = scmp.eq.s32.totalorder %s18, 0
    %p258 = por %p256, %p257
    %p259 = scmp.ne.s32.totalorder %s248, %s251
    %p260 = scmp.eq.s32.totalorder %s23, 1
    %p261 = por %p259, %p260
    %p262 = scmp.ne.s32.totalorder %s251, %s252
    %p263 = scmp.eq.s32.totalorder %s23, 0
    %p264 = por %p262, %p263
    %p265 = scmp.ne.s32.totalorder %s251, %s252
    %p266 = scmp.eq.s32.totalorder %s24, 1
    %p267 = por %p265, %p266
    %p269 = scmp.ne.s32.totalorder %s252, %s268
    %p270 = scmp.eq.s32.totalorder %s24, 0
    %p271 = por %p269, %p270
    %s272 = ssub.s32 %s25, %s37
    %s273 = ssub.s32 %s26, %s33
    %s274 = sor.u32 %s272, %s273
    %p275 = scmp.eq.s32.totalorder %s274, 0
    %s277 = sadd.s32 %s276, 1
    %s278 = scalar_select %p275, %s276, %s277
    %p281 = pneg %p275
    %p282 = scmp.eq.s32.totalorder %s18, 1
    %p283 = por %p281, %p282
    %p284 = scmp.ne.s32.totalorder %s276, %s279
    %p285 = scmp.eq.s32.totalorder %s18, 0
    %p286 = por %p284, %p285
    %p287 = scmp.ne.s32.totalorder %s276, %s279
    %p288 = scmp.eq.s32.totalorder %s23, 1
    %p289 = por %p287, %p288
    %p290 = scmp.ne.s32.totalorder %s279, %s280
    %p291 = scmp.eq.s32.totalorder %s23, 0
    %p292 = por %p290, %p291
    %p293 = scmp.ne.s32.totalorder %s279, %s280
    %p294 = scmp.eq.s32.totalorder %s24, 1
    %p295 = por %p293, %p294
    %p297 = scmp.ne.s32.totalorder %s280, %s296
    %p298 = scmp.eq.s32.totalorder %s24, 0
    %p299 = por %p297, %p298
    %s300 = ssub.s32 %s25, %s37
    %s301 = ssub.s32 %s26, %s33
    %s302 = sor.u32 %s300, %s301
    %p303 = scmp.eq.s32.totalorder %s302, 0
    %s305 = sadd.s32 %s304, 1
    %s306 = scalar_select %p303, %s304, %s305
    %p309 = pneg %p303
    %p310 = scmp.eq.s32.totalorder %s18, 1
    %p311 = por %p309, %p310
    %p312 = scmp.ne.s32.totalorder %s304, %s307
    %p313 = scmp.eq.s32.totalorder %s18, 0
    %p314 = por %p312, %p313
    %p315 = scmp.ne.s32.totalorder %s304, %s307
    %p316 = scmp.eq.s32.totalorder %s23, 1
    %p317 = por %p315, %p316
    %p318 = scmp.ne.s32.totalorder %s307, %s308
    %p319 = scmp.eq.s32.totalorder %s23, 0
    %p320 = por %p318, %p319
    %p321 = scmp.ne.s32.totalorder %s307, %s308
    %p322 = scmp.eq.s32.totalorder %s24, 1
    %p323 = por %p321, %p322
    %p325 = scmp.ne.s32.totalorder %s308, %s324
    %p326 = scmp.eq.s32.totalorder %s24, 0
    %p327 = por %p325, %p326
    %p328 = scmp.le.s32.totalorder 1, %s18
    %p329 = scmp.lt.s32.totalorder %s18, 3
    %p330 = pnand %p328, %p329
    %p331 = pneg %p330
    // Predicated region
    $region9: #{spectral_gating_forward.3} parent=5 // pred_check
      _
    $region10: #{spectral_gating_forward.3} parent=5 // pred_check_branch
      %333 = sbr.rel (%p330) target = $region12
    $region11: #{spectral_gating_forward.3} parent=5 // pred_region
      %s334 = ssub.s32 %s18, 1
      // Predicated region
      $region13: #{spectral_gating_forward.3} parent=11 // pred_check
        %p335 = pneg %p107
      $region14: #{spectral_gating_forward.3} parent=11 // pred_check_branch
        %337 = sbr.rel (%p335) target = $region16
      $region15: #{spectral_gating_forward.3} parent=11 // pred_region
        _
      $region16: #{spectral_gating_forward.3} parent=11 // pred_fallthru
        _
      // Predicated region
      $region17: #{spectral_gating_forward.3} parent=11 // pred_check
        %p338 = pneg %p128
      $region18: #{spectral_gating_forward.3} parent=11 // pred_check_branch
        %340 = sbr.rel (%p338) target = $region20
      $region19: #{spectral_gating_forward.3} parent=11 // pred_region
        _
      $region20: #{spectral_gating_forward.3} parent=11 // pred_fallthru
        _
      // Predicated region
      $region21: #{spectral_gating_forward.3} parent=11 // pred_check
        %p341 = pneg %p149
      $region22: #{spectral_gating_forward.3} parent=11 // pred_check_branch
        %343 = sbr.rel (%p341) target = $region24
      $region23: #{spectral_gating_forward.3} parent=11 // pred_region
        _
      $region24: #{spectral_gating_forward.3} parent=11 // pred_fallthru
        _
      // Predicated region
      $region25: #{spectral_gating_forward.3} parent=11 // pred_check
        %p344 = pneg %p170
      $region26: #{spectral_gating_forward.3} parent=11 // pred_check_branch
        %346 = sbr.rel (%p344) target = $region28
      $region27: #{spectral_gating_forward.3} parent=11 // pred_region
        _
      $region28: #{spectral_gating_forward.3} parent=11 // pred_fallthru
        _
      // Predicated region
      $region29: #{spectral_gating_forward.3} parent=11 // pred_check
        %p347 = pneg %p191
      $region30: #{spectral_gating_forward.3} parent=11 // pred_check_branch
        %349 = sbr.rel (%p347) target = $region32
      $region31: #{spectral_gating_forward.3} parent=11 // pred_region
        _
      $region32: #{spectral_gating_forward.3} parent=11 // pred_fallthru
        _
      // Predicated region
      $region33: #{spectral_gating_forward.3} parent=11 // pred_check
        %p350 = pneg %p212
      $region34: #{spectral_gating_forward.3} parent=11 // pred_check_branch
        %352 = sbr.rel (%p350) target = $region36
      $region35: #{spectral_gating_forward.3} parent=11 // pred_region
        _
      $region36: #{spectral_gating_forward.3} parent=11 // pred_fallthru
        _
      // Predicated region
      $region37: #{spectral_gating_forward.3} parent=11 // pred_check
        %p353 = pneg %p238
      $region38: #{spectral_gating_forward.3} parent=11 // pred_check_branch
        %355 = sbr.rel (%p353) target = $region40
      $region39: #{spectral_gating_forward.3} parent=11 // pred_region
        %s356 = smul.u32 2, %s28
        %p357 = scmp.lt.s32.totalorder %s356, 1
        %s358 = scalar_select %p357, %s356, 1
        %s359 = smul.addr %s358, 4
        %s360 = scalar_lea.vmem %s8, %s359
        %s361 = smul.u32 2, %s28
      $region40: #{spectral_gating_forward.3} parent=11 // pred_fallthru
        _
      // Predicated region
      $region41: #{spectral_gating_forward.3} parent=11 // pred_check
        %p362 = pneg %p264
      $region42: #{spectral_gating_forward.3} parent=11 // pred_check_branch
        %364 = sbr.rel (%p362) target = $region44
      $region43: #{spectral_gating_forward.3} parent=11 // pred_region
        %s365 = smul.u32 2, %s28
        %p366 = scmp.lt.s32.totalorder %s365, 1
        %s367 = scalar_select %p366, %s365, 1
        %s368 = smul.addr %s367, 4
        %s369 = scalar_lea.vmem %s9, %s368
        %s370 = smul.u32 2, %s28
      $region44: #{spectral_gating_forward.3} parent=11 // pred_fallthru
        _
    $region12: #{spectral_gating_forward.3} parent=5 // pred_fallthru
      _
    %p371 = scmp.lt.s32.totalorder %s18, 2
    // Predicated region
    $region45: #{spectral_gating_forward.3} parent=5 // pred_check
      %p372 = pneg %p371
    $region46: #{spectral_gating_forward.3} parent=5 // pred_check_branch
      %374 = sbr.rel (%p372) target = $region48
    $region47: #{spectral_gating_forward.3} parent=5 // pred_region
      // Predicated region
      $region49: #{spectral_gating_forward.3} parent=47 // pred_check
        %p375 = pneg %p52
      $region50: #{spectral_gating_forward.3} parent=47 // pred_check_branch
        %377 = sbr.rel (%p375) target = $region52
      $region51: #{spectral_gating_forward.3} parent=47 // pred_region
        %s378 = smul.u32 2, %s26
        %p379 = scmp.lt.s32.totalorder %s25, 1
        %s380 = scalar_select %p379, %s25, 1
        %p381 = scmp.lt.s32.totalorder %s378, 1
        %s382 = scalar_select %p381, %s378, 1
        %s383 = smul.addr %s380, 4
        %s384 = sadd.s32 %s382, %s383
        %s385 = smul.addr %s384, 4
        %s386 = scalar_lea.vmem %s0, %s385
        %s387 = smul.u32 2, %s26
      $region52: #{spectral_gating_forward.3} parent=47 // pred_fallthru
        _
      // Predicated region
      $region53: #{spectral_gating_forward.3} parent=47 // pred_check
        %p388 = pneg %p80
      $region54: #{spectral_gating_forward.3} parent=47 // pred_check_branch
        %390 = sbr.rel (%p388) target = $region56
      $region55: #{spectral_gating_forward.3} parent=47 // pred_region
        %s391 = smul.u32 2, %s26
        %p392 = scmp.lt.s32.totalorder %s25, 1
        %s393 = scalar_select %p392, %s25, 1
        %p394 = scmp.lt.s32.totalorder %s391, 1
        %s395 = scalar_select %p394, %s391, 1
        %s396 = smul.addr %s393, 4
        %s397 = sadd.s32 %s395, %s396
        %s398 = smul.addr %s397, 4
        %s399 = scalar_lea.vmem %s1, %s398
        %s400 = smul.u32 2, %s26
      $region56: #{spectral_gating_forward.3} parent=47 // pred_fallthru
        _
    $region48: #{spectral_gating_forward.3} parent=5 // pred_fallthru
      _
    %p401 = scmp.le.s32.totalorder 1, %s18
    %p402 = scmp.lt.s32.totalorder %s18, 3
    %p403 = pnand %p401, %p402
    %p404 = pneg %p403
    // Predicated region
    $region57: #{spectral_gating_forward.3} parent=5 // pred_check
      _
    $region58: #{spectral_gating_forward.3} parent=5 // pred_check_branch
      %406 = sbr.rel (%p403) target = $region60
    $region59: #{spectral_gating_forward.3} parent=5 // pred_region
      %s407 = ssub.s32 %s18, 1
      %s408 = smul.u32 2, %s28
      %p409 = scmp.lt.s32.totalorder %s27, 1
      %s410 = scalar_select %p409, %s27, 1
      %p411 = scmp.lt.s32.totalorder %s408, 1
      %s412 = scalar_select %p411, %s408, 1
      %s413 = smul.addr %s410, 4
      %s414 = sadd.s32 %s412, %s413
      %s415 = smul.addr %s414, 4
      %s416 = scalar_lea.vmem %s0, %s415
      %p417 = pneg %p58
      %p418 = pneg %p55
      %s419 = smul.u32 2, %s28
      %p420 = scmp.lt.s32.totalorder %s27, 1
      %s421 = scalar_select %p420, %s27, 1
      %p422 = scmp.lt.s32.totalorder %s419, 1
      %s423 = scalar_select %p422, %s419, 1
      %s424 = smul.addr %s421, 4
      %s425 = sadd.s32 %s423, %s424
      %s426 = smul.addr %s425, 4
      %s427 = scalar_lea.vmem %s1, %s426
      %p428 = pneg %p86
      %p429 = pneg %p83
      %p430 = pneg %p107
      %p431 = pneg %p104
      %p432 = pneg %p128
      %p433 = pneg %p125
      %p434 = pneg %p149
      %p435 = pneg %p146
      %p436 = pneg %p170
      %p437 = pneg %p167
      %p438 = pneg %p191
      %p439 = pneg %p188
      %p440 = pneg %p212
      %p441 = pneg %p209
      %s442 = smul.u32 2, %s28
      %p443 = scmp.lt.s32.totalorder %s442, 1
      %s444 = scalar_select %p443, %s442, 1
      %s445 = smul.addr %s444, 4
      %s446 = scalar_lea.vmem %s8, %s445
      %p447 = pneg %p238
      %p448 = pneg %p235
      %s449 = smul.u32 2, %s28
      %p450 = scmp.lt.s32.totalorder %s449, 1
      %s451 = scalar_select %p450, %s449, 1
      %s452 = smul.addr %s451, 4
      %s453 = scalar_lea.vmem %s9, %s452
      %p454 = pneg %p264
      %p455 = pneg %p261
      %p456 = pneg %p292
      %p457 = pneg %p289
      %s458 = smul.u32 2, %s28
      %p459 = scmp.lt.s32.totalorder %s27, 1
      %s460 = scalar_select %p459, %s27, 1
      %p461 = scmp.lt.s32.totalorder %s458, 1
      %s462 = scalar_select %p461, %s458, 1
      %s463 = smul.addr %s460, 4
      %s464 = sadd.s32 %s462, %s463
      %s465 = smul.addr %s464, 4
      %s466 = scalar_lea.vmem %s10, %s465
      %p467 = pneg %p320
      %p468 = pneg %p317
      %s469 = smul.u32 2, %s28
      %p470 = scmp.lt.s32.totalorder %s27, 1
      %s471 = scalar_select %p470, %s27, 1
      %p472 = scmp.lt.s32.totalorder %s469, 1
      %s473 = scalar_select %p472, %s469, 1
      %s474 = smul.addr %s471, 4
      %s475 = sadd.s32 %s473, %s474
      %s476 = smul.addr %s475, 4
      %s477 = scalar_lea.vmem %s11, %s476
      %s478 = smul.u32 2, %s28
      %p479 = scmp.lt.s32.totalorder %s27, 1
      %s480 = scalar_select %p479, %s27, 1
      %p481 = scmp.lt.s32.totalorder %s478, 1
      %s482 = scalar_select %p481, %s478, 1
      %s483 = smul.addr %s480, 4
      %s484 = sadd.s32 %s482, %s483
      %s485 = smul.addr %s484, 4
      %s486 = scalar_lea.vmem %s0, %s485
      %s487 = smul.u32 2, %s28
      %s488 = smul.u32 2, %s28
      %p489 = scmp.lt.s32.totalorder %s27, 1
      %s490 = scalar_select %p489, %s27, 1
      %p491 = scmp.lt.s32.totalorder %s488, 1
      %s492 = scalar_select %p491, %s488, 1
      %s493 = smul.addr %s490, 4
      %s494 = sadd.s32 %s492, %s493
      %s495 = smul.addr %s494, 4
      %s496 = scalar_lea.vmem %s1, %s495
      %s497 = smul.u32 2, %s28
      %s498 = smul.u32 2, %s28
      %p499 = scmp.lt.s32.totalorder %s498, 1
      %s500 = scalar_select %p499, %s498, 1
      %s501 = smul.addr %s500, 4
      %s502 = scalar_lea.vmem %s8, %s501
      %s503 = smul.u32 2, %s28
      %s504 = smul.u32 2, %s28
      %p505 = scmp.lt.s32.totalorder %s504, 1
      %s506 = scalar_select %p505, %s504, 1
      %s507 = smul.addr %s506, 4
      %s508 = scalar_lea.vmem %s9, %s507
      %s509 = smul.u32 2, %s28
      %s510 = smul.u32 2, %s28
      %p511 = scmp.lt.s32.totalorder %s27, 1
      %s512 = scalar_select %p511, %s27, 1
      %p513 = scmp.lt.s32.totalorder %s510, 1
      %s514 = scalar_select %p513, %s510, 1
      %s515 = smul.addr %s512, 4
      %s516 = sadd.s32 %s514, %s515
      %s517 = smul.addr %s516, 4
      %s518 = scalar_lea.vmem %s10, %s517
      %s519 = smul.u32 2, %s28
      %s520 = smul.u32 2, %s28
      %p521 = scmp.lt.s32.totalorder %s27, 1
      %s522 = scalar_select %p521, %s27, 1
      %p523 = scmp.lt.s32.totalorder %s520, 1
      %s524 = scalar_select %p523, %s520, 1
      %s525 = smul.addr %s522, 4
      %s526 = sadd.s32 %s524, %s525
      %s527 = smul.addr %s526, 4
      %s528 = scalar_lea.vmem %s11, %s527
      %s529 = smul.u32 2, %s28
      %v531 = vld [vmem:[%s2] sm:$0xf]
      %v532 = vld [vmem:[%s2 + $0x4] sm:$0xf]
      %v533 = vld [vmem:[%s486] sm:$0xff]
      %v534 = vld [vmem:[%s486 + $0x8] sm:$0xff]
      %v537 = vunpack.c.l.b16 %v531
      %v538 = vunpack.c.l.b16 %v532
      %v539 = vpack.c.b16 %v538, %v537
      %v542 = vunpack.c.l.b16 %v533
      %v543 = vunpack.c.h.b16 %v533
      %v544 = vunpack.c.l.b16 %v534
      %v545 = vunpack.c.h.b16 %v534
      %v546 = vpack.c.b16 %v544, %v542
      %v547 = vpack.c.b16 %v545, %v543
      %vm550 = vcmask 130048
      %v552 = vsel %vm550, %v539, 0
      %554 = vmatprep.subr.bf16.mxu0 0
      %555 = vmatpush1.bf16.msra.mxu0 0
      %556 = vmatprep.subr.bf16.mxu0 0
      %557 = vmatpush1.bf16.msra.mxu0 0
      %558 = vmatprep.subr.bf16.mxu0 0
      %559 = vmatpush1.bf16.msra.mxu0 0
      %560 = vmatprep.subr.bf16.mxu0 0
      %561 = vmatpush1.bf16.msra.mxu0 0
      %562 = vmatprep.subr.bf16.mxu0 0
      %563 = vmatpush1.bf16.msra.mxu0 0
      %564 = vmatprep.subr.bf16.mxu0 0
      %565 = vmatpush1.bf16.msra.mxu0 0
      %566 = vmatprep.subr.bf16.mxu0 0
      %567 = vmatpush1.bf16.msra.mxu0 0
      %568 = vmatprep.subr.bf16.mxu0 %v547
      %569 = vmatpush1.bf16.msra.mxu0 %v546
      %570 = vmatprep.subr.bf16.mxu0 0
      %571 = vmatpush2.bf16.msra.mxu0 0
      %572 = vmatprep.subr.bf16.mxu0 0
      %573 = vmatpush2.bf16.msra.mxu0 0
      %574 = vmatprep.subr.bf16.mxu0 0
      %575 = vmatpush2.bf16.msra.mxu0 0
      %576 = vmatprep.subr.bf16.mxu0 0
      %577 = vmatpush2.bf16.msra.mxu0 0
      %578 = vmatprep.subr.bf16.mxu0 0
      %579 = vmatpush2.bf16.msra.mxu0 0
      %580 = vmatprep.subr.bf16.mxu0 0
      %581 = vmatpush2.bf16.msra.mxu0 0
      %582 = vmatprep.subr.bf16.mxu0 0
      %583 = vmatpush2.bf16.msra.mxu0 0
      %584 = vmatprep.subr.bf16.mxu0 0
      %585 = vmatpush2.bf16.msra.mxu0 0
      %586 = vmatprep.mubr.bf16.mxu0 0
      %587 = vmatmul.mubr.bf16.gmra.mxu0 %v552
      %v588 = vpop.f32.mrf.mxu0
      %v589 = vadd.f32 0.0, %v588
      %v590 = vpop.f32.mrf.mxu0
      %v591 = vadd.f32 0.0, %v590
      %v592 = vpop.f32.mrf.mxu0
      %v593 = vadd.f32 0.0, %v592
      %v594 = vpop.f32.mrf.mxu0
      %v595 = vadd.f32 0.0, %v594
      %596 = vdwg.mxu0
      %v597 = vld [vmem:[%s3] sm:$0xf]
      %v598 = vld [vmem:[%s3 + $0x4] sm:$0xf]
      %v599 = vld [vmem:[%s496] sm:$0xff]
      %v600 = vld [vmem:[%s496 + $0x8] sm:$0xff]
      %v603 = vunpack.c.l.b16 %v597
      %v604 = vunpack.c.l.b16 %v598
      %v605 = vpack.c.b16 %v604, %v603
      %v608 = vunpack.c.l.b16 %v599
      %v609 = vunpack.c.h.b16 %v599
      %v610 = vunpack.c.l.b16 %v600
      %v611 = vunpack.c.h.b16 %v600
      %v612 = vpack.c.b16 %v610, %v608
      %v613 = vpack.c.b16 %v611, %v609
      %v617 = vsel %vm550, %v605, 0
      %619 = vmatprep.subr.bf16.mxu0 0
      %620 = vmatpush1.bf16.msra.mxu0 0
      %621 = vmatprep.subr.bf16.mxu0 0
      %622 = vmatpush1.bf16.msra.mxu0 0
      %623 = vmatprep.subr.bf16.mxu0 0
      %624 = vmatpush1.bf16.msra.mxu0 0
      %625 = vmatprep.subr.bf16.mxu0 0
      %626 = vmatpush1.bf16.msra.mxu0 0
      %627 = vmatprep.subr.bf16.mxu0 0
      %628 = vmatpush1.bf16.msra.mxu0 0
      %629 = vmatprep.subr.bf16.mxu0 0
      %630 = vmatpush1.bf16.msra.mxu0 0
      %631 = vmatprep.subr.bf16.mxu0 0
      %632 = vmatpush1.bf16.msra.mxu0 0
      %633 = vmatprep.subr.bf16.mxu0 %v613
      %634 = vmatpush1.bf16.msra.mxu0 %v612
      %635 = vmatprep.subr.bf16.mxu0 0
      %636 = vmatpush2.bf16.msra.mxu0 0
      %637 = vmatprep.subr.bf16.mxu0 0
      %638 = vmatpush2.bf16.msra.mxu0 0
      %639 = vmatprep.subr.bf16.mxu0 0
      %640 = vmatpush2.bf16.msra.mxu0 0
      %641 = vmatprep.subr.bf16.mxu0 0
      %642 = vmatpush2.bf16.msra.mxu0 0
      %643 = vmatprep.subr.bf16.mxu0 0
      %644 = vmatpush2.bf16.msra.mxu0 0
      %645 = vmatprep.subr.bf16.mxu0 0
      %646 = vmatpush2.bf16.msra.mxu0 0
      %647 = vmatprep.subr.bf16.mxu0 0
      %648 = vmatpush2.bf16.msra.mxu0 0
      %649 = vmatprep.subr.bf16.mxu0 0
      %650 = vmatpush2.bf16.msra.mxu0 0
      %651 = vmatprep.mubr.bf16.mxu0 0
      %652 = vmatmul.mubr.bf16.gmra.mxu0 %v617
      %v653 = vpop.f32.mrf.mxu0
      %v654 = vadd.f32 0.0, %v653
      %v655 = vpop.f32.mrf.mxu0
      %v656 = vadd.f32 0.0, %v655
      %v657 = vpop.f32.mrf.mxu0
      %v658 = vadd.f32 0.0, %v657
      %v659 = vpop.f32.mrf.mxu0
      %v660 = vadd.f32 0.0, %v659
      %661 = vdwg.mxu0
      %v662 = vld [vmem:[%s4] sm:$0xff]
      %v663 = vld [vmem:[%s4 + $0x8] sm:$0xff]
      %665 = vset.pattern.permute.xlu0 0
      %666 = vperm.xlu0 %665, %v662
      %v667 = vpop.permute.xlu0 %666
      %670 = vset.pattern.permute.xlu0 0
      %671 = vperm.xlu0 %670, %v663
      %v672 = vpop.permute.xlu0 %671
      %v674 = vmul.f32 %v589, %v667
      %v675 = vmul.f32 %v591, %v667
      %v676 = vmul.f32 %v593, %v672
      %v677 = vmul.f32 %v595, %v672
      %v678 = vld [vmem:[%s5] sm:$0xff]
      %v679 = vld [vmem:[%s5 + $0x8] sm:$0xff]
      %681 = vset.pattern.permute.xlu0 0
      %682 = vperm.xlu0 %681, %v678
      %v683 = vpop.permute.xlu0 %682
      %686 = vset.pattern.permute.xlu0 0
      %687 = vperm.xlu0 %686, %v679
      %v688 = vpop.permute.xlu0 %687
      %v690 = vadd.f32 %v674, %v683
      %v691 = vadd.f32 %v675, %v683
      %v692 = vadd.f32 %v676, %v688
      %v693 = vadd.f32 %v677, %v688
      %v694 = vmax.f32 %v690, 0.0
      %v695 = vmax.f32 %v691, 0.0
      %v696 = vmax.f32 %v692, 0.0
      %v697 = vmax.f32 %v693, 0.0
      %v698 = vld [vmem:[%s6] sm:$0xff]
      %v699 = vld [vmem:[%s6 + $0x8] sm:$0xff]
      %701 = vset.pattern.permute.xlu0 0
      %702 = vperm.xlu0 %701, %v698
      %v703 = vpop.permute.xlu0 %702
      %706 = vset.pattern.permute.xlu0 0
      %707 = vperm.xlu0 %706, %v699
      %v708 = vpop.permute.xlu0 %707
      %v710 = vmul.f32 %v654, %v703
      %v711 = vmul.f32 %v656, %v703
      %v712 = vmul.f32 %v658, %v708
      %v713 = vmul.f32 %v660, %v708
      %v714 = vld [vmem:[%s7] sm:$0xff]
      %v715 = vld [vmem:[%s7 + $0x8] sm:$0xff]
      %717 = vset.pattern.permute.xlu0 0
      %718 = vperm.xlu0 %717, %v714
      %v719 = vpop.permute.xlu0 %718
      %722 = vset.pattern.permute.xlu0 0
      %723 = vperm.xlu0 %722, %v715
      %v724 = vpop.permute.xlu0 %723
      %v726 = vadd.f32 %v710, %v719
      %v727 = vadd.f32 %v711, %v719
      %v728 = vadd.f32 %v712, %v724
      %v729 = vadd.f32 %v713, %v724
      %v730 = vmax.f32 %v726, 0.0
      %v731 = vmax.f32 %v727, 0.0
      %v732 = vmax.f32 %v728, 0.0
      %v733 = vmax.f32 %v729, 0.0
      %v734 = vld [vmem:[%s502] sm:$0xff]
      %v735 = vld [vmem:[%s502 + $0x8] sm:$0xff]
      %v736 = vunpack.c.l.bf16 %v734
      %v737 = vunpack.c.h.bf16 %v734
      %v738 = vunpack.c.l.bf16 %v735
      %v739 = vunpack.c.h.bf16 %v735
      %v740 = vld [vmem:[%s508] sm:$0xff]
      %v741 = vld [vmem:[%s508 + $0x8] sm:$0xff]
      %v742 = vunpack.c.l.bf16 %v740
      %v743 = vunpack.c.h.bf16 %v740
      %v744 = vunpack.c.l.bf16 %v741
      %v745 = vunpack.c.h.bf16 %v741
      %v746 = vmul.f32 %v694, %v736
      %v747 = vmul.f32 %v695, %v737
      %v748 = vmul.f32 %v696, %v738
      %v749 = vmul.f32 %v697, %v739
      %v750 = vmul.f32 %v730, %v742
      %v751 = vmul.f32 %v731, %v743
      %v752 = vmul.f32 %v732, %v744
      %v753 = vmul.f32 %v733, %v745
      %v754 = vsub.f32 %v746, %v750
      %v755 = vsub.f32 %v747, %v751
      %v756 = vsub.f32 %v748, %v752
      %v757 = vsub.f32 %v749, %v753
      %v758 = vpack.c.bf16 %v756, %v754
      %v759 = vpack.c.bf16 %v757, %v755
      %v762 = vunpack.c.l.b16 %v758
      %v763 = vunpack.c.l.b16 %v759
      %v764 = vunpack.c.h.b16 %v758
      %v765 = vunpack.c.h.b16 %v759
      %v766 = vpack.c.b16 %v763, %v762
      %v767 = vpack.c.b16 %v765, %v764
      %770 = vst [vmem:[%s518] sm:$0xff] %v766
      %771 = vst [vmem:[%s518 + $0x8] sm:$0xff] %v767
      %v772 = vmul.f32 %v694, %v742
      %v773 = vmul.f32 %v695, %v743
      %v774 = vmul.f32 %v696, %v744
      %v775 = vmul.f32 %v697, %v745
      %v776 = vmul.f32 %v730, %v736
      %v777 = vmul.f32 %v731, %v737
      %v778 = vmul.f32 %v732, %v738
      %v779 = vmul.f32 %v733, %v739
      %v780 = vadd.f32 %v772, %v776
      %v781 = vadd.f32 %v773, %v777
      %v782 = vadd.f32 %v774, %v778
      %v783 = vadd.f32 %v775, %v779
      %v784 = vpack.c.bf16 %v782, %v780
      %v785 = vpack.c.bf16 %v783, %v781
      %v788 = vunpack.c.l.b16 %v784
      %v789 = vunpack.c.l.b16 %v785
      %v790 = vunpack.c.h.b16 %v784
      %v791 = vunpack.c.h.b16 %v785
      %v792 = vpack.c.b16 %v789, %v788
      %v793 = vpack.c.b16 %v791, %v790
      %796 = vst [vmem:[%s528] sm:$0xff] %v792
      %797 = vst [vmem:[%s528 + $0x8] sm:$0xff] %v793
      %s798 = smul.u32 2, %s28
      %p799 = scmp.lt.s32.totalorder %s27, 1
      %s800 = scalar_select %p799, %s27, 1
      %p801 = scmp.lt.s32.totalorder %s798, 1
      %s802 = scalar_select %p801, %s798, 1
      %s803 = smul.addr %s800, 4
      %s804 = sadd.s32 %s802, %s803
      %s805 = smul.addr %s804, 4
      %s806 = scalar_lea.vmem %s10, %s805
      %s807 = smul.u32 2, %s28
      %p808 = scmp.lt.s32.totalorder %s27, 1
      %s809 = scalar_select %p808, %s27, 1
      %p810 = scmp.lt.s32.totalorder %s807, 1
      %s811 = scalar_select %p810, %s807, 1
      %s812 = smul.addr %s809, 4
      %s813 = sadd.s32 %s811, %s812
      %s814 = smul.addr %s813, 4
      %s815 = scalar_lea.vmem %s11, %s814
      // Predicated region
      $region61: #{spectral_gating_forward.3} parent=59 // pred_check
        %p816 = pneg %p289
      $region62: #{spectral_gating_forward.3} parent=59 // pred_check_branch
        %818 = sbr.rel (%p816) target = $region64
      $region63: #{spectral_gating_forward.3} parent=59 // pred_region
        %s819 = smul.u32 2, %s28
      $region64: #{spectral_gating_forward.3} parent=59 // pred_fallthru
        _
      // Predicated region
      $region65: #{spectral_gating_forward.3} parent=59 // pred_check
        %p820 = pneg %p317
      $region66: #{spectral_gating_forward.3} parent=59 // pred_check_branch
        %822 = sbr.rel (%p820) target = $region68
      $region67: #{spectral_gating_forward.3} parent=59 // pred_region
        %s823 = smul.u32 2, %s28
      $region68: #{spectral_gating_forward.3} parent=59 // pred_fallthru
        _
    $region60: #{spectral_gating_forward.3} parent=5 // pred_fallthru
      _
    %p824 = scmp.le.s32.totalorder 2, %s18
    // Predicated region
    $region69: #{spectral_gating_forward.3} parent=5 // pred_check
      %p825 = pneg %p824
    $region70: #{spectral_gating_forward.3} parent=5 // pred_check_branch
      %827 = sbr.rel (%p825) target = $region72
    $region71: #{spectral_gating_forward.3} parent=5 // pred_region
      %s828 = ssub.s32 %s18, 2
      // Predicated region
      $region73: #{spectral_gating_forward.3} parent=71 // pred_check
        %p829 = pneg %p295
      $region74: #{spectral_gating_forward.3} parent=71 // pred_check_branch
        %831 = sbr.rel (%p829) target = $region76
      $region75: #{spectral_gating_forward.3} parent=71 // pred_region
        %s832 = smul.u32 2, %s30
        %p833 = scmp.lt.s32.totalorder %s29, 1
        %s834 = scalar_select %p833, %s29, 1
        %p835 = scmp.lt.s32.totalorder %s832, 1
        %s836 = scalar_select %p835, %s832, 1
        %s837 = smul.addr %s834, 4
        %s838 = sadd.s32 %s836, %s837
        %s839 = smul.addr %s838, 4
        %s840 = scalar_lea.vmem %s10, %s839
      $region76: #{spectral_gating_forward.3} parent=71 // pred_fallthru
        _
      // Predicated region
      $region77: #{spectral_gating_forward.3} parent=71 // pred_check
        %p841 = pneg %p323
      $region78: #{spectral_gating_forward.3} parent=71 // pred_check_branch
        %843 = sbr.rel (%p841) target = $region80
      $region79: #{spectral_gating_forward.3} parent=71 // pred_region
        %s844 = smul.u32 2, %s30
        %p845 = scmp.lt.s32.totalorder %s29, 1
        %s846 = scalar_select %p845, %s29, 1
        %p847 = scmp.lt.s32.totalorder %s844, 1
        %s848 = scalar_select %p847, %s844, 1
        %s849 = smul.addr %s846, 4
        %s850 = sadd.s32 %s848, %s849
        %s851 = smul.addr %s850, 4
        %s852 = scalar_lea.vmem %s11, %s851
      $region80: #{spectral_gating_forward.3} parent=71 // pred_fallthru
        _
    $region72: #{spectral_gating_forward.3} parent=5 // pred_fallthru
      _
  $region6: #{spectral_gating_forward.3} parent=0 // loop_footer
    %s22 = sadd.s32 1, %s18
  $region7: #{spectral_gating_forward.3} parent=0 // loop_footer_branch
    %17 = sbr.rel target = $region3
  $region8: #{spectral_gating_forward.3} parent=0 // loop_exit
    _

// kernel: reverse.1
$region0: #{reverse.1}
  #allocation0 [shape = 's32[1]{0}', space=sflag, size = 0x4, scoped, tag = 'scoped memory for reverse.1']
  %s0 = inlined_call_operand.vmem [shape: f32[2,16,16,7], index: 0, kind: input, shape index: {}]
  %s1 = inlined_call_operand.vmem [shape: f32[2,16,16,7], index: 1, kind: output, shape index: {}]
  %s2 = scalar_lea.vmem %s0, 96
  %v3 = vld [vmem:[%s2] sm:$0xff]
  %4 = vst [vmem:[%s1] sm:$0xff] %v3
  %s5 = scalar_lea.vmem %s0, 208
  %v6 = vld [vmem:[%s5] sm:$0xff]
  %s7 = scalar_lea.vmem %s1, 112
  %8 = vst [vmem:[%s7] sm:$0xff] %v6
  %s9 = scalar_lea.vmem %s0, 80
  %v10 = vld [vmem:[%s9] sm:$0xff]
  %s11 = scalar_lea.vmem %s1, 16
  %12 = vst [vmem:[%s11] sm:$0xff] %v10
  %s13 = scalar_lea.vmem %s0, 192
  %v14 = vld [vmem:[%s13] sm:$0xff]
  %s15 = scalar_lea.vmem %s1, 128
  %16 = vst [vmem:[%s15] sm:$0xff] %v14
  %s17 = scalar_lea.vmem %s0, 64
  %v18 = vld [vmem:[%s17] sm:$0xff]
  %s19 = scalar_lea.vmem %s1, 32
  %20 = vst [vmem:[%s19] sm:$0xff] %v18
  %s21 = scalar_lea.vmem %s0, 176
  %v22 = vld [vmem:[%s21] sm:$0xff]
  %s23 = scalar_lea.vmem %s1, 144
  %24 = vst [vmem:[%s23] sm:$0xff] %v22
  %s25 = scalar_lea.vmem %s0, 48
  %v26 = vld [vmem:[%s25] sm:$0xff]
  %s27 = scalar_lea.vmem %s1, 48
  %28 = vst [vmem:[%s27] sm:$0xff] %v26
  %s29 = scalar_lea.vmem %s0, 160
  %v30 = vld [vmem:[%s29] sm:$0xff]
  %s31 = scalar_lea.vmem %s1, 160
  %32 = vst [vmem:[%s31] sm:$0xff] %v30
  %s33 = scalar_lea.vmem %s0, 32
  %v34 = vld [vmem:[%s33] sm:$0xff]
  %s35 = scalar_lea.vmem %s1, 64
  %36 = vst [vmem:[%s35] sm:$0xff] %v34
  %s37 = scalar_lea.vmem %s0, 144
  %v38 = vld [vmem:[%s37] sm:$0xff]
  %s39 = scalar_lea.vmem %s1, 176
  %40 = vst [vmem:[%s39] sm:$0xff] %v38
  %s41 = scalar_lea.vmem %s0, 16
  %v42 = vld [vmem:[%s41] sm:$0xff]
  %s43 = scalar_lea.vmem %s1, 80
  %44 = vst [vmem:[%s43] sm:$0xff] %v42
  %s45 = scalar_lea.vmem %s0, 128
  %v46 = vld [vmem:[%s45] sm:$0xff]
  %s47 = scalar_lea.vmem %s1, 192
  %48 = vst [vmem:[%s47] sm:$0xff] %v46
  %v49 = vld [vmem:[%s0] sm:$0xff]
  %s50 = scalar_lea.vmem %s1, 96
  %51 = vst [vmem:[%s50] sm:$0xff] %v49
  %s52 = scalar_lea.vmem %s0, 112
  %v53 = vld [vmem:[%s52] sm:$0xff]
  %s54 = scalar_lea.vmem %s1, 208
  %55 = vst [vmem:[%s54] sm:$0xff] %v53
  %s56 = scalar_lea.vmem %s0, 104
  %v57 = vld [vmem:[%s56] sm:$0xff]
  %s58 = scalar_lea.vmem %s1, 8
  %59 = vst [vmem:[%s58] sm:$0xff] %v57
  %s60 = scalar_lea.vmem %s0, 216
  %v61 = vld [vmem:[%s60] sm:$0xff]
  %s62 = scalar_lea.vmem %s1, 120
  %63 = vst [vmem:[%s62] sm:$0xff] %v61
  %s64 = scalar_lea.vmem %s0, 88
  %v65 = vld [vmem:[%s64] sm:$0xff]
  %s66 = scalar_lea.vmem %s1, 24
  %67 = vst [vmem:[%s66] sm:$0xff] %v65
  %s68 = scalar_lea.vmem %s0, 200
  %v69 = vld [vmem:[%s68] sm:$0xff]
  %s70 = scalar_lea.vmem %s1, 136
  %71 = vst [vmem:[%s70] sm:$0xff] %v69
  %s72 = scalar_lea.vmem %s0, 72
  %v73 = vld [vmem:[%s72] sm:$0xff]
  %s74 = scalar_lea.vmem %s1, 40
  %75 = vst [vmem:[%s74] sm:$0xff] %v73
  %s76 = scalar_lea.vmem %s0, 184
  %v77 = vld [vmem:[%s76] sm:$0xff]
  %s78 = scalar_lea.vmem %s1, 152
  %79 = vst [vmem:[%s78] sm:$0xff] %v77
  %s80 = scalar_lea.vmem %s0, 56
  %v81 = vld [vmem:[%s80] sm:$0xff]
  %s82 = scalar_lea.vmem %s1, 56
  %83 = vst [vmem:[%s82] sm:$0xff] %v81
  %s84 = scalar_lea.vmem %s0, 168
  %v85 = vld [vmem:[%s84] sm:$0xff]
  %s86 = scalar_lea.vmem %s1, 168
  %87 = vst [vmem:[%s86] sm:$0xff] %v85
  %s88 = scalar_lea.vmem %s0, 40
  %v89 = vld [vmem:[%s88] sm:$0xff]
  %s90 = scalar_lea.vmem %s1, 72
  %91 = vst [vmem:[%s90] sm:$0xff] %v89
  %s92 = scalar_lea.vmem %s0, 152
  %v93 = vld [vmem:[%s92] sm:$0xff]
  %s94 = scalar_lea.vmem %s1, 184
  %95 = vst [vmem:[%s94] sm:$0xff] %v93
  %s96 = scalar_lea.vmem %s0, 24
  %v97 = vld [vmem:[%s96] sm:$0xff]
  %s98 = scalar_lea.vmem %s1, 88
  %99 = vst [vmem:[%s98] sm:$0xff] %v97
  %s100 = scalar_lea.vmem %s0, 136
  %v101 = vld [vmem:[%s100] sm:$0xff]
  %s102 = scalar_lea.vmem %s1, 200
  %103 = vst [vmem:[%s102] sm:$0xff] %v101
  %s104 = scalar_lea.vmem %s0, 8
  %v105 = vld [vmem:[%s104] sm:$0xff]
  %s106 = scalar_lea.vmem %s1, 104
  %107 = vst [vmem:[%s106] sm:$0xff] %v105
  %s108 = scalar_lea.vmem %s0, 120
  %v109 = vld [vmem:[%s108] sm:$0xff]
  %s110 = scalar_lea.vmem %s1, 216
  %111 = vst [vmem:[%s110] sm:$0xff] %v109

</llo_original>
